<compile_context>
chip_gen: v6e
topology: v6e:2x2x1
jax: 0.10.0
libtpu: 0.0.40
codegen_flags: <defaults>
</compile_context>

<pallas_src>
import functools

import jax
import jax.numpy as jnp
from jax.experimental import pallas as pl
from jax.experimental.pallas import tpu as pltpu


def _upsample_kernel(x_ref, w_ref, b_ref, pe_ref, po_ref, o_ref, *, C, th, W):
    """Fused 1x1-conv + PixelShuffle(2) for one (batch, row-block) tile.

    x_ref:  (1, Cin, th*W)    input rows h0..h0+th-1, spatially flattened (lane-dense)
    w_ref:  (4C, Cin)         conv weight, rows permuted to (j, i, c) order
    b_ref:  (4C, 1)           f32 bias, same row order (pre-cast in the wrapper)
    pe_ref: (W, 2W)           f32 0/1 matrix, Pe[w, 2w]   = 1  (even output columns)
    po_ref: (W, 2W)           f32 0/1 matrix, Po[w, 2w+1] = 1  (odd output columns)
    o_ref:  (1, C, 2*th, 2W)  final NCHW output rows 2*h0 .. 2*h0 + 2*th - 1
    """
    # 1x1 conv as one MXU matmul with the big spatial dim on the lane axis.
    yp = jnp.dot(w_ref[...], x_ref[0], preferred_element_type=jnp.float32)
    yp = yp + b_ref[...]                      # (4C, th*W), f32

    a = yp[: 2 * C]                           # j == 0 channels, rows ordered (i, c)
    b = yp[2 * C:]                            # j == 1 channels, rows ordered (i, c)
    pe = pe_ref[...]
    po = po_ref[...]

    # Short unrolled loop over the input rows of this block (th <= 8 normally).
    for t in range(th):
        sa = a[:, t * W:(t + 1) * W]          # (2C, W): even-column contributions
        sb = b[:, t * W:(t + 1) * W]          # (2C, W): odd-column contributions
        # Lane interleave on the MXU: z[r, 2w + j] = (sa, sb)[j][r, w]
        z = (jnp.dot(sa, pe, preferred_element_type=jnp.float32)
             + jnp.dot(sb, po, preferred_element_type=jnp.float32))   # (2C, 2W)
        # Rows [0, C) of z are output-row-parity i = 0, rows [C, 2C) are i = 1.
        o_ref[0, :, 2 * t, :] = z[:C].astype(o_ref.dtype)       # output row 2h
        o_ref[0, :, 2 * t + 1, :] = z[C:].astype(o_ref.dtype)   # output row 2h + 1


def _pick_row_block(H, W, B, *, max_unroll=8, min_steps=4):
    """Input rows per grid step.

    Constraints:
      * th divides H (no padding, no ragged blocks),
      * input block last dim th*W is a multiple of 128 (or the full H*W),
      * output block 2nd-to-last dim 2*th is a multiple of 8 (or the full 2H),
      * th <= max_unroll (bounds the per-step unrolled interleave loop),
      * prefer B*(H//th) >= min_steps so v7x's two TensorCores both get work.
    """
    def ok(th):
        lane_ok = (th * W) % 128 == 0 or th == H
        sub_ok = (2 * th) % 8 == 0 or th == H
        return lane_ok and sub_ok

    divs = [d for d in range(1, H + 1) if H % d == 0 and ok(d)]
    good = [d for d in divs if d <= max_unroll and B * (H // d) >= min_steps]
    if good:
        return max(good)
    good = [d for d in divs if d <= max_unroll]
    if good:
        return max(good)
    # TODO(synk): full-height fallback unrolls H iterations; fine for small H,
    # heavy on trace/compile time for very tall, oddly-shaped images.
    return H


def upsample_pallas(x_nchw, weight, bias, channel):
    """UpSample.forward: Conv2d(2C -> 4C, k=1) + PixelShuffle(2), fused.

    x_nchw: (B, 2C, H, W), weight: (4C, 2C) (Conv2d 1x1 weight squeezed),
    bias: (4C,).  Returns (B, C, 2H, 2W) in NCHW, matching PyTorch.
    """
    B, Cin, H, W = x_nchw.shape
    C = channel
    Cout = weight.shape[0]
    assert Cin == 2 * C and Cout == 4 * C
    dtype = x_nchw.dtype
    itemsize = jnp.dtype(dtype).itemsize

    # PixelShuffle maps original channel o = 4c + 2i + j to out[b, c, 2h+i, 2w+j].
    # Permute weight/bias rows to (j, i, c) order so the matmul output is already
    # grouped by output-column parity (j) then output-row parity (i).
    w_p = weight.reshape(C, 2, 2, Cin).transpose(2, 1, 0, 3).reshape(Cout, Cin)
    b_p = bias.reshape(C, 2, 2).transpose(2, 1, 0).reshape(Cout, 1).astype(jnp.float32)

    # Riffle matrices: [a @ Pe + b @ Po][:, 2w + j] picks a[:, w] (j=0) / b[:, w] (j=1).
    w_idx = jnp.arange(W)
    pe = jnp.zeros((W, 2 * W), jnp.float32).at[w_idx, 2 * w_idx].set(1.0)
    po = jnp.zeros((W, 2 * W), jnp.float32).at[w_idx, 2 * w_idx + 1].set(1.0)

    th = _pick_row_block(H, W, B)
    grid = (B, H // th)

    x_flat = x_nchw.reshape(B, Cin, H * W)     # layout-preserving, no copy

    kernel = functools.partial(_upsample_kernel, C=C, th=th, W=W)

    conv_flops = 2 * B * H * W * Cin * Cout
    riffle_flops = 16 * B * H * C * W * W
    bytes_accessed = (itemsize * (B * Cin * H * W + B * Cout * H * W)
                      + 4 * (Cout * Cin + Cout + 2 * W * 2 * W))

    out = pl.pallas_call(
        kernel,
        out_shape=jax.ShapeDtypeStruct((B, C, 2 * H, 2 * W), dtype),
        grid_spec=pltpu.PrefetchScalarGridSpec(
            num_scalar_prefetch=0,
            grid=grid,
            in_specs=[
                pl.BlockSpec((1, Cin, th * W), lambda b, r: (b, 0, r)),
                pl.BlockSpec((Cout, Cin), lambda b, r: (0, 0)),       # grid-invariant
                pl.BlockSpec((Cout, 1), lambda b, r: (0, 0)),         # grid-invariant
                pl.BlockSpec((W, 2 * W), lambda b, r: (0, 0)),        # grid-invariant
                pl.BlockSpec((W, 2 * W), lambda b, r: (0, 0)),        # grid-invariant
            ],
            out_specs=pl.BlockSpec((1, C, 2 * th, 2 * W), lambda b, r: (b, 0, r, 0)),
        ),
        compiler_params=pltpu.CompilerParams(
            dimension_semantics=("parallel", "parallel"),
            # <= v7x's 64 MiB physical VMEM, above v5e's 16 MiB default scoped limit.
            vmem_limit_bytes=40 * 1024 * 1024,
        ),
        cost_estimate=pl.CostEstimate(
            flops=conv_flops + riffle_flops,
            transcendentals=0,
            bytes_accessed=int(bytes_accessed)),
    )(x_flat, w_p, b_p, pe, po)
    return out


if __name__ == "__main__":
    channel = 4
    B, H, W = 2, 16, 16
    Cin, Cout = 2 * channel, 4 * channel

    key = jax.random.PRNGKey(0)
    kx, kw, kb = jax.random.split(key, 3)
    x = jax.random.normal(kx, (B, Cin, H, W), dtype=jnp.float32)
    # Deterministic synthetic Conv2d(Cin -> Cout, kernel=1, bias=True) parameters.
    weight = jax.random.normal(kw, (Cout, Cin), dtype=jnp.float32) * 0.1
    bias = jax.random.normal(kb, (Cout,), dtype=jnp.float32) * 0.1

    out = upsample_pallas(x, weight, bias, channel)
    out = jax.block_until_ready(out)

    # Pure-JAX reference: 1x1 conv (channel matmul) + PixelShuffle(2).
    y_ref = jnp.einsum("bchw,oc->bohw", x, weight,
                       precision=jax.lax.Precision.HIGHEST) + bias[None, :, None, None]
    y_ref = y_ref.reshape(B, channel, 2, 2, H, W)
    ref = jnp.transpose(y_ref, (0, 1, 4, 2, 5, 3)).reshape(B, channel, 2 * H, 2 * W)

    assert out.shape == (B, channel, 2 * H, 2 * W)
    # Tolerance covers MXU f32/bf16-pass differences; a wrong shuffle/weight
    # permutation would produce O(1) errors and still fail this check.
    assert jnp.allclose(out, ref, atol=2e-2, rtol=2e-2)
    print("KERNEL_OK")
</pallas_src>

<mosaic_0001>
module attributes {stable_mosaic.version = 11 : i64} {
  func.func @_upsample_kernel(%arg0: i32, %arg1: i32, %arg2: memref<1x8x128xf32, #tpu.memory_space<vmem>>, %arg3: memref<16x8xf32, #tpu.memory_space<vmem>>, %arg4: memref<16x1xf32, #tpu.memory_space<vmem>>, %arg5: memref<16x32xf32, #tpu.memory_space<vmem>>, %arg6: memref<16x32xf32, #tpu.memory_space<vmem>>, %arg7: memref<1x4x16x32xf32, #tpu.memory_space<vmem>>) attributes {dimension_semantics = [#tpu.dimension_semantics<parallel>, #tpu.dimension_semantics<parallel>], iteration_bounds = array<i64: 2, 2>, scalar_prefetch = 0 : i64, scratch_operands = 0 : i64, tpu.core_type = #tpu.core_type<tc>, window_params = [{transform_indices = @transform_0, window_bounds = array<i64: 1, 8, 128>}, {pipeline_mode = #tpu.pipeline_mode<synchronous>, transform_indices = @transform_1, window_bounds = array<i64: 16, 8>}, {pipeline_mode = #tpu.pipeline_mode<synchronous>, transform_indices = @transform_2, window_bounds = array<i64: 16, 1>}, {pipeline_mode = #tpu.pipeline_mode<synchronous>, transform_indices = @transform_3, window_bounds = array<i64: 16, 32>}, {pipeline_mode = #tpu.pipeline_mode<synchronous>, transform_indices = @transform_4, window_bounds = array<i64: 16, 32>}, {transform_indices = @transform_5, window_bounds = array<i64: 1, 4, 16, 32>}]} {
    %c0 = arith.constant 0 : index
    %c0_0 = arith.constant 0 : index
    %0 = vector.load %arg3[%c0, %c0_0] : memref<16x8xf32, #tpu.memory_space<vmem>>, vector<16x8xf32>
    %c0_1 = arith.constant 0 : index
    %c0_2 = arith.constant 0 : index
    %c0_3 = arith.constant 0 : index
    %1 = vector.load %arg2[%c0_1, %c0_2, %c0_3] : memref<1x8x128xf32, #tpu.memory_space<vmem>>, vector<1x8x128xf32>
    %2 = vector.shape_cast %1 : vector<1x8x128xf32> to vector<8x128xf32>
    %cst = arith.constant dense<0.000000e+00> : vector<16x128xf32>
    %3 = tpu.matmul %0, %2, %cst {dimension_numbers = #tpu.dot_dimension_numbers<[1], [0], [0], [1], [0, 0, 1, 1], [], []>} : vector<16x8xf32>, vector<8x128xf32>, vector<16x128xf32> -> vector<16x128xf32>
    %c0_4 = arith.constant 0 : index
    %c0_5 = arith.constant 0 : index
    %4 = vector.load %arg4[%c0_4, %c0_5] : memref<16x1xf32, #tpu.memory_space<vmem>>, vector<16x1xf32>
    %5 = vector.broadcast %4 : vector<16x1xf32> to vector<16x128xf32>
    %6 = arith.addf %3, %5 : vector<16x128xf32>
    %7 = vector.extract_strided_slice %6 {offsets = [0, 0], sizes = [8, 128], strides = [1, 1]} : vector<16x128xf32> to vector<8x128xf32>
    %8 = vector.extract_strided_slice %6 {offsets = [8, 0], sizes = [8, 128], strides = [1, 1]} : vector<16x128xf32> to vector<8x128xf32>
    %c0_6 = arith.constant 0 : index
    %c0_7 = arith.constant 0 : index
    %9 = vector.load %arg5[%c0_6, %c0_7] : memref<16x32xf32, #tpu.memory_space<vmem>>, vector<16x32xf32>
    %c0_8 = arith.constant 0 : index
    %c0_9 = arith.constant 0 : index
    %10 = vector.load %arg6[%c0_8, %c0_9] : memref<16x32xf32, #tpu.memory_space<vmem>>, vector<16x32xf32>
    %11 = vector.extract_strided_slice %7 {offsets = [0, 0], sizes = [8, 16], strides = [1, 1]} : vector<8x128xf32> to vector<8x16xf32>
    %12 = vector.extract_strided_slice %8 {offsets = [0, 0], sizes = [8, 16], strides = [1, 1]} : vector<8x128xf32> to vector<8x16xf32>
    %cst_10 = arith.constant dense<0.000000e+00> : vector<8x32xf32>
    %13 = tpu.matmul %11, %9, %cst_10 {dimension_numbers = #tpu.dot_dimension_numbers<[1], [0], [0], [1], [0, 0, 1, 1], [], []>} : vector<8x16xf32>, vector<16x32xf32>, vector<8x32xf32> -> vector<8x32xf32>
    %cst_11 = arith.constant dense<0.000000e+00> : vector<8x32xf32>
    %14 = tpu.matmul %12, %10, %cst_11 {dimension_numbers = #tpu.dot_dimension_numbers<[1], [0], [0], [1], [0, 0, 1, 1], [], []>} : vector<8x16xf32>, vector<16x32xf32>, vector<8x32xf32> -> vector<8x32xf32>
    %15 = arith.addf %13, %14 : vector<8x32xf32>
    %16 = vector.extract_strided_slice %15 {offsets = [0, 0], sizes = [4, 32], strides = [1, 1]} : vector<8x32xf32> to vector<4x32xf32>
    %c0_12 = arith.constant 0 : index
    %c0_13 = arith.constant 0 : index
    %c0_14 = arith.constant 0 : index
    %c0_15 = arith.constant 0 : index
    %17 = vector.load %arg7[%c0_12, %c0_13, %c0_14, %c0_15] : memref<1x4x16x32xf32, #tpu.memory_space<vmem>>, vector<1x4x1x32xf32>
    %18 = vector.shape_cast %17 : vector<1x4x1x32xf32> to vector<4x32xf32>
    %19 = vector.shape_cast %16 : vector<4x32xf32> to vector<1x4x1x32xf32>
    tpu.vector_store %arg7[%c0_12, %c0_13, %c0_14, %c0_15], %19 {strides = array<i32>} : memref<1x4x16x32xf32, #tpu.memory_space<vmem>>, vector<1x4x1x32xf32>,
    %20 = vector.extract_strided_slice %15 {offsets = [4, 0], sizes = [4, 32], strides = [1, 1]} : vector<8x32xf32> to vector<4x32xf32>
    %c0_16 = arith.constant 0 : index
    %c0_17 = arith.constant 0 : index
    %c1 = arith.constant 1 : index
    %c0_18 = arith.constant 0 : index
    %21 = vector.load %arg7[%c0_16, %c0_17, %c1, %c0_18] : memref<1x4x16x32xf32, #tpu.memory_space<vmem>>, vector<1x4x1x32xf32>
    %22 = vector.shape_cast %21 : vector<1x4x1x32xf32> to vector<4x32xf32>
    %23 = vector.shape_cast %20 : vector<4x32xf32> to vector<1x4x1x32xf32>
    tpu.vector_store %arg7[%c0_16, %c0_17, %c1, %c0_18], %23 {strides = array<i32>} : memref<1x4x16x32xf32, #tpu.memory_space<vmem>>, vector<1x4x1x32xf32>,
    %24 = vector.extract_strided_slice %7 {offsets = [0, 16], sizes = [8, 16], strides = [1, 1]} : vector<8x128xf32> to vector<8x16xf32>
    %25 = vector.extract_strided_slice %8 {offsets = [0, 16], sizes = [8, 16], strides = [1, 1]} : vector<8x128xf32> to vector<8x16xf32>
    %cst_19 = arith.constant dense<0.000000e+00> : vector<8x32xf32>
    %26 = tpu.matmul %24, %9, %cst_19 {dimension_numbers = #tpu.dot_dimension_numbers<[1], [0], [0], [1], [0, 0, 1, 1], [], []>} : vector<8x16xf32>, vector<16x32xf32>, vector<8x32xf32> -> vector<8x32xf32>
    %cst_20 = arith.constant dense<0.000000e+00> : vector<8x32xf32>
    %27 = tpu.matmul %25, %10, %cst_20 {dimension_numbers = #tpu.dot_dimension_numbers<[1], [0], [0], [1], [0, 0, 1, 1], [], []>} : vector<8x16xf32>, vector<16x32xf32>, vector<8x32xf32> -> vector<8x32xf32>
    %28 = arith.addf %26, %27 : vector<8x32xf32>
    %29 = vector.extract_strided_slice %28 {offsets = [0, 0], sizes = [4, 32], strides = [1, 1]} : vector<8x32xf32> to vector<4x32xf32>
    %c0_21 = arith.constant 0 : index
    %c0_22 = arith.constant 0 : index
    %c2 = arith.constant 2 : index
    %c0_23 = arith.constant 0 : index
    %30 = vector.load %arg7[%c0_21, %c0_22, %c2, %c0_23] : memref<1x4x16x32xf32, #tpu.memory_space<vmem>>, vector<1x4x1x32xf32>
    %31 = vector.shape_cast %30 : vector<1x4x1x32xf32> to vector<4x32xf32>
    %32 = vector.shape_cast %29 : vector<4x32xf32> to vector<1x4x1x32xf32>
    tpu.vector_store %arg7[%c0_21, %c0_22, %c2, %c0_23], %32 {strides = array<i32>} : memref<1x4x16x32xf32, #tpu.memory_space<vmem>>, vector<1x4x1x32xf32>,
    %33 = vector.extract_strided_slice %28 {offsets = [4, 0], sizes = [4, 32], strides = [1, 1]} : vector<8x32xf32> to vector<4x32xf32>
    %c0_24 = arith.constant 0 : index
    %c0_25 = arith.constant 0 : index
    %c3 = arith.constant 3 : index
    %c0_26 = arith.constant 0 : index
    %34 = vector.load %arg7[%c0_24, %c0_25, %c3, %c0_26] : memref<1x4x16x32xf32, #tpu.memory_space<vmem>>, vector<1x4x1x32xf32>
    %35 = vector.shape_cast %34 : vector<1x4x1x32xf32> to vector<4x32xf32>
    %36 = vector.shape_cast %33 : vector<4x32xf32> to vector<1x4x1x32xf32>
    tpu.vector_store %arg7[%c0_24, %c0_25, %c3, %c0_26], %36 {strides = array<i32>} : memref<1x4x16x32xf32, #tpu.memory_space<vmem>>, vector<1x4x1x32xf32>,
    %37 = vector.extract_strided_slice %7 {offsets = [0, 32], sizes = [8, 16], strides = [1, 1]} : vector<8x128xf32> to vector<8x16xf32>
    %38 = vector.extract_strided_slice %8 {offsets = [0, 32], sizes = [8, 16], strides = [1, 1]} : vector<8x128xf32> to vector<8x16xf32>
    %cst_27 = arith.constant dense<0.000000e+00> : vector<8x32xf32>
    %39 = tpu.matmul %37, %9, %cst_27 {dimension_numbers = #tpu.dot_dimension_numbers<[1], [0], [0], [1], [0, 0, 1, 1], [], []>} : vector<8x16xf32>, vector<16x32xf32>, vector<8x32xf32> -> vector<8x32xf32>
    %cst_28 = arith.constant dense<0.000000e+00> : vector<8x32xf32>
    %40 = tpu.matmul %38, %10, %cst_28 {dimension_numbers = #tpu.dot_dimension_numbers<[1], [0], [0], [1], [0, 0, 1, 1], [], []>} : vector<8x16xf32>, vector<16x32xf32>, vector<8x32xf32> -> vector<8x32xf32>
    %41 = arith.addf %39, %40 : vector<8x32xf32>
    %42 = vector.extract_strided_slice %41 {offsets = [0, 0], sizes = [4, 32], strides = [1, 1]} : vector<8x32xf32> to vector<4x32xf32>
    %c0_29 = arith.constant 0 : index
    %c0_30 = arith.constant 0 : index
    %c4 = arith.constant 4 : index
    %c0_31 = arith.constant 0 : index
    %43 = vector.load %arg7[%c0_29, %c0_30, %c4, %c0_31] : memref<1x4x16x32xf32, #tpu.memory_space<vmem>>, vector<1x4x1x32xf32>
    %44 = vector.shape_cast %43 : vector<1x4x1x32xf32> to vector<4x32xf32>
    %45 = vector.shape_cast %42 : vector<4x32xf32> to vector<1x4x1x32xf32>
    tpu.vector_store %arg7[%c0_29, %c0_30, %c4, %c0_31], %45 {strides = array<i32>} : memref<1x4x16x32xf32, #tpu.memory_space<vmem>>, vector<1x4x1x32xf32>,
    %46 = vector.extract_strided_slice %41 {offsets = [4, 0], sizes = [4, 32], strides = [1, 1]} : vector<8x32xf32> to vector<4x32xf32>
    %c0_32 = arith.constant 0 : index
    %c0_33 = arith.constant 0 : index
    %c5 = arith.constant 5 : index
    %c0_34 = arith.constant 0 : index
    %47 = vector.load %arg7[%c0_32, %c0_33, %c5, %c0_34] : memref<1x4x16x32xf32, #tpu.memory_space<vmem>>, vector<1x4x1x32xf32>
    %48 = vector.shape_cast %47 : vector<1x4x1x32xf32> to vector<4x32xf32>
    %49 = vector.shape_cast %46 : vector<4x32xf32> to vector<1x4x1x32xf32>
    tpu.vector_store %arg7[%c0_32, %c0_33, %c5, %c0_34], %49 {strides = array<i32>} : memref<1x4x16x32xf32, #tpu.memory_space<vmem>>, vector<1x4x1x32xf32>,
    %50 = vector.extract_strided_slice %7 {offsets = [0, 48], sizes = [8, 16], strides = [1, 1]} : vector<8x128xf32> to vector<8x16xf32>
    %51 = vector.extract_strided_slice %8 {offsets = [0, 48], sizes = [8, 16], strides = [1, 1]} : vector<8x128xf32> to vector<8x16xf32>
    %cst_35 = arith.constant dense<0.000000e+00> : vector<8x32xf32>
    %52 = tpu.matmul %50, %9, %cst_35 {dimension_numbers = #tpu.dot_dimension_numbers<[1], [0], [0], [1], [0, 0, 1, 1], [], []>} : vector<8x16xf32>, vector<16x32xf32>, vector<8x32xf32> -> vector<8x32xf32>
    %cst_36 = arith.constant dense<0.000000e+00> : vector<8x32xf32>
    %53 = tpu.matmul %51, %10, %cst_36 {dimension_numbers = #tpu.dot_dimension_numbers<[1], [0], [0], [1], [0, 0, 1, 1], [], []>} : vector<8x16xf32>, vector<16x32xf32>, vector<8x32xf32> -> vector<8x32xf32>
    %54 = arith.addf %52, %53 : vector<8x32xf32>
    %55 = vector.extract_strided_slice %54 {offsets = [0, 0], sizes = [4, 32], strides = [1, 1]} : vector<8x32xf32> to vector<4x32xf32>
    %c0_37 = arith.constant 0 : index
    %c0_38 = arith.constant 0 : index
    %c6 = arith.constant 6 : index
    %c0_39 = arith.constant 0 : index
    %56 = vector.load %arg7[%c0_37, %c0_38, %c6, %c0_39] : memref<1x4x16x32xf32, #tpu.memory_space<vmem>>, vector<1x4x1x32xf32>
    %57 = vector.shape_cast %56 : vector<1x4x1x32xf32> to vector<4x32xf32>
    %58 = vector.shape_cast %55 : vector<4x32xf32> to vector<1x4x1x32xf32>
    tpu.vector_store %arg7[%c0_37, %c0_38, %c6, %c0_39], %58 {strides = array<i32>} : memref<1x4x16x32xf32, #tpu.memory_space<vmem>>, vector<1x4x1x32xf32>,
    %59 = vector.extract_strided_slice %54 {offsets = [4, 0], sizes = [4, 32], strides = [1, 1]} : vector<8x32xf32> to vector<4x32xf32>
    %c0_40 = arith.constant 0 : index
    %c0_41 = arith.constant 0 : index
    %c7 = arith.constant 7 : index
    %c0_42 = arith.constant 0 : index
    %60 = vector.load %arg7[%c0_40, %c0_41, %c7, %c0_42] : memref<1x4x16x32xf32, #tpu.memory_space<vmem>>, vector<1x4x1x32xf32>
    %61 = vector.shape_cast %60 : vector<1x4x1x32xf32> to vector<4x32xf32>
    %62 = vector.shape_cast %59 : vector<4x32xf32> to vector<1x4x1x32xf32>
    tpu.vector_store %arg7[%c0_40, %c0_41, %c7, %c0_42], %62 {strides = array<i32>} : memref<1x4x16x32xf32, #tpu.memory_space<vmem>>, vector<1x4x1x32xf32>,
    %63 = vector.extract_strided_slice %7 {offsets = [0, 64], sizes = [8, 16], strides = [1, 1]} : vector<8x128xf32> to vector<8x16xf32>
    %64 = vector.extract_strided_slice %8 {offsets = [0, 64], sizes = [8, 16], strides = [1, 1]} : vector<8x128xf32> to vector<8x16xf32>
    %cst_43 = arith.constant dense<0.000000e+00> : vector<8x32xf32>
    %65 = tpu.matmul %63, %9, %cst_43 {dimension_numbers = #tpu.dot_dimension_numbers<[1], [0], [0], [1], [0, 0, 1, 1], [], []>} : vector<8x16xf32>, vector<16x32xf32>, vector<8x32xf32> -> vector<8x32xf32>
    %cst_44 = arith.constant dense<0.000000e+00> : vector<8x32xf32>
    %66 = tpu.matmul %64, %10, %cst_44 {dimension_numbers = #tpu.dot_dimension_numbers<[1], [0], [0], [1], [0, 0, 1, 1], [], []>} : vector<8x16xf32>, vector<16x32xf32>, vector<8x32xf32> -> vector<8x32xf32>
    %67 = arith.addf %65, %66 : vector<8x32xf32>
    %68 = vector.extract_strided_slice %67 {offsets = [0, 0], sizes = [4, 32], strides = [1, 1]} : vector<8x32xf32> to vector<4x32xf32>
    %c0_45 = arith.constant 0 : index
    %c0_46 = arith.constant 0 : index
    %c8 = arith.constant 8 : index
    %c0_47 = arith.constant 0 : index
    %69 = vector.load %arg7[%c0_45, %c0_46, %c8, %c0_47] : memref<1x4x16x32xf32, #tpu.memory_space<vmem>>, vector<1x4x1x32xf32>
    %70 = vector.shape_cast %69 : vector<1x4x1x32xf32> to vector<4x32xf32>
    %71 = vector.shape_cast %68 : vector<4x32xf32> to vector<1x4x1x32xf32>
    tpu.vector_store %arg7[%c0_45, %c0_46, %c8, %c0_47], %71 {strides = array<i32>} : memref<1x4x16x32xf32, #tpu.memory_space<vmem>>, vector<1x4x1x32xf32>,
    %72 = vector.extract_strided_slice %67 {offsets = [4, 0], sizes = [4, 32], strides = [1, 1]} : vector<8x32xf32> to vector<4x32xf32>
    %c0_48 = arith.constant 0 : index
    %c0_49 = arith.constant 0 : index
    %c9 = arith.constant 9 : index
    %c0_50 = arith.constant 0 : index
    %73 = vector.load %arg7[%c0_48, %c0_49, %c9, %c0_50] : memref<1x4x16x32xf32, #tpu.memory_space<vmem>>, vector<1x4x1x32xf32>
    %74 = vector.shape_cast %73 : vector<1x4x1x32xf32> to vector<4x32xf32>
    %75 = vector.shape_cast %72 : vector<4x32xf32> to vector<1x4x1x32xf32>
    tpu.vector_store %arg7[%c0_48, %c0_49, %c9, %c0_50], %75 {strides = array<i32>} : memref<1x4x16x32xf32, #tpu.memory_space<vmem>>, vector<1x4x1x32xf32>,
    %76 = vector.extract_strided_slice %7 {offsets = [0, 80], sizes = [8, 16], strides = [1, 1]} : vector<8x128xf32> to vector<8x16xf32>
    %77 = vector.extract_strided_slice %8 {offsets = [0, 80], sizes = [8, 16], strides = [1, 1]} : vector<8x128xf32> to vector<8x16xf32>
    %cst_51 = arith.constant dense<0.000000e+00> : vector<8x32xf32>
    %78 = tpu.matmul %76, %9, %cst_51 {dimension_numbers = #tpu.dot_dimension_numbers<[1], [0], [0], [1], [0, 0, 1, 1], [], []>} : vector<8x16xf32>, vector<16x32xf32>, vector<8x32xf32> -> vector<8x32xf32>
    %cst_52 = arith.constant dense<0.000000e+00> : vector<8x32xf32>
    %79 = tpu.matmul %77, %10, %cst_52 {dimension_numbers = #tpu.dot_dimension_numbers<[1], [0], [0], [1], [0, 0, 1, 1], [], []>} : vector<8x16xf32>, vector<16x32xf32>, vector<8x32xf32> -> vector<8x32xf32>
    %80 = arith.addf %78, %79 : vector<8x32xf32>
    %81 = vector.extract_strided_slice %80 {offsets = [0, 0], sizes = [4, 32], strides = [1, 1]} : vector<8x32xf32> to vector<4x32xf32>
    %c0_53 = arith.constant 0 : index
    %c0_54 = arith.constant 0 : index
    %c10 = arith.constant 10 : index
    %c0_55 = arith.constant 0 : index
    %82 = vector.load %arg7[%c0_53, %c0_54, %c10, %c0_55] : memref<1x4x16x32xf32, #tpu.memory_space<vmem>>, vector<1x4x1x32xf32>
    %83 = vector.shape_cast %82 : vector<1x4x1x32xf32> to vector<4x32xf32>
    %84 = vector.shape_cast %81 : vector<4x32xf32> to vector<1x4x1x32xf32>
    tpu.vector_store %arg7[%c0_53, %c0_54, %c10, %c0_55], %84 {strides = array<i32>} : memref<1x4x16x32xf32, #tpu.memory_space<vmem>>, vector<1x4x1x32xf32>,
    %85 = vector.extract_strided_slice %80 {offsets = [4, 0], sizes = [4, 32], strides = [1, 1]} : vector<8x32xf32> to vector<4x32xf32>
    %c0_56 = arith.constant 0 : index
    %c0_57 = arith.constant 0 : index
    %c11 = arith.constant 11 : index
    %c0_58 = arith.constant 0 : index
    %86 = vector.load %arg7[%c0_56, %c0_57, %c11, %c0_58] : memref<1x4x16x32xf32, #tpu.memory_space<vmem>>, vector<1x4x1x32xf32>
    %87 = vector.shape_cast %86 : vector<1x4x1x32xf32> to vector<4x32xf32>
    %88 = vector.shape_cast %85 : vector<4x32xf32> to vector<1x4x1x32xf32>
    tpu.vector_store %arg7[%c0_56, %c0_57, %c11, %c0_58], %88 {strides = array<i32>} : memref<1x4x16x32xf32, #tpu.memory_space<vmem>>, vector<1x4x1x32xf32>,
    %89 = vector.extract_strided_slice %7 {offsets = [0, 96], sizes = [8, 16], strides = [1, 1]} : vector<8x128xf32> to vector<8x16xf32>
    %90 = vector.extract_strided_slice %8 {offsets = [0, 96], sizes = [8, 16], strides = [1, 1]} : vector<8x128xf32> to vector<8x16xf32>
    %cst_59 = arith.constant dense<0.000000e+00> : vector<8x32xf32>
    %91 = tpu.matmul %89, %9, %cst_59 {dimension_numbers = #tpu.dot_dimension_numbers<[1], [0], [0], [1], [0, 0, 1, 1], [], []>} : vector<8x16xf32>, vector<16x32xf32>, vector<8x32xf32> -> vector<8x32xf32>
    %cst_60 = arith.constant dense<0.000000e+00> : vector<8x32xf32>
    %92 = tpu.matmul %90, %10, %cst_60 {dimension_numbers = #tpu.dot_dimension_numbers<[1], [0], [0], [1], [0, 0, 1, 1], [], []>} : vector<8x16xf32>, vector<16x32xf32>, vector<8x32xf32> -> vector<8x32xf32>
    %93 = arith.addf %91, %92 : vector<8x32xf32>
    %94 = vector.extract_strided_slice %93 {offsets = [0, 0], sizes = [4, 32], strides = [1, 1]} : vector<8x32xf32> to vector<4x32xf32>
    %c0_61 = arith.constant 0 : index
    %c0_62 = arith.constant 0 : index
    %c12 = arith.constant 12 : index
    %c0_63 = arith.constant 0 : index
    %95 = vector.load %arg7[%c0_61, %c0_62, %c12, %c0_63] : memref<1x4x16x32xf32, #tpu.memory_space<vmem>>, vector<1x4x1x32xf32>
    %96 = vector.shape_cast %95 : vector<1x4x1x32xf32> to vector<4x32xf32>
    %97 = vector.shape_cast %94 : vector<4x32xf32> to vector<1x4x1x32xf32>
    tpu.vector_store %arg7[%c0_61, %c0_62, %c12, %c0_63], %97 {strides = array<i32>} : memref<1x4x16x32xf32, #tpu.memory_space<vmem>>, vector<1x4x1x32xf32>,
    %98 = vector.extract_strided_slice %93 {offsets = [4, 0], sizes = [4, 32], strides = [1, 1]} : vector<8x32xf32> to vector<4x32xf32>
    %c0_64 = arith.constant 0 : index
    %c0_65 = arith.constant 0 : index
    %c13 = arith.constant 13 : index
    %c0_66 = arith.constant 0 : index
    %99 = vector.load %arg7[%c0_64, %c0_65, %c13, %c0_66] : memref<1x4x16x32xf32, #tpu.memory_space<vmem>>, vector<1x4x1x32xf32>
    %100 = vector.shape_cast %99 : vector<1x4x1x32xf32> to vector<4x32xf32>
    %101 = vector.shape_cast %98 : vector<4x32xf32> to vector<1x4x1x32xf32>
    tpu.vector_store %arg7[%c0_64, %c0_65, %c13, %c0_66], %101 {strides = array<i32>} : memref<1x4x16x32xf32, #tpu.memory_space<vmem>>, vector<1x4x1x32xf32>,
    %102 = vector.extract_strided_slice %7 {offsets = [0, 112], sizes = [8, 16], strides = [1, 1]} : vector<8x128xf32> to vector<8x16xf32>
    %103 = vector.extract_strided_slice %8 {offsets = [0, 112], sizes = [8, 16], strides = [1, 1]} : vector<8x128xf32> to vector<8x16xf32>
    %cst_67 = arith.constant dense<0.000000e+00> : vector<8x32xf32>
    %104 = tpu.matmul %102, %9, %cst_67 {dimension_numbers = #tpu.dot_dimension_numbers<[1], [0], [0], [1], [0, 0, 1, 1], [], []>} : vector<8x16xf32>, vector<16x32xf32>, vector<8x32xf32> -> vector<8x32xf32>
    %cst_68 = arith.constant dense<0.000000e+00> : vector<8x32xf32>
    %105 = tpu.matmul %103, %10, %cst_68 {dimension_numbers = #tpu.dot_dimension_numbers<[1], [0], [0], [1], [0, 0, 1, 1], [], []>} : vector<8x16xf32>, vector<16x32xf32>, vector<8x32xf32> -> vector<8x32xf32>
    %106 = arith.addf %104, %105 : vector<8x32xf32>
    %107 = vector.extract_strided_slice %106 {offsets = [0, 0], sizes = [4, 32], strides = [1, 1]} : vector<8x32xf32> to vector<4x32xf32>
    %c0_69 = arith.constant 0 : index
    %c0_70 = arith.constant 0 : index
    %c14 = arith.constant 14 : index
    %c0_71 = arith.constant 0 : index
    %108 = vector.load %arg7[%c0_69, %c0_70, %c14, %c0_71] : memref<1x4x16x32xf32, #tpu.memory_space<vmem>>, vector<1x4x1x32xf32>
    %109 = vector.shape_cast %108 : vector<1x4x1x32xf32> to vector<4x32xf32>
    %110 = vector.shape_cast %107 : vector<4x32xf32> to vector<1x4x1x32xf32>
    tpu.vector_store %arg7[%c0_69, %c0_70, %c14, %c0_71], %110 {strides = array<i32>} : memref<1x4x16x32xf32, #tpu.memory_space<vmem>>, vector<1x4x1x32xf32>,
    %111 = vector.extract_strided_slice %106 {offsets = [4, 0], sizes = [4, 32], strides = [1, 1]} : vector<8x32xf32> to vector<4x32xf32>
    %c0_72 = arith.constant 0 : index
    %c0_73 = arith.constant 0 : index
    %c15 = arith.constant 15 : index
    %c0_74 = arith.constant 0 : index
    %112 = vector.load %arg7[%c0_72, %c0_73, %c15, %c0_74] : memref<1x4x16x32xf32, #tpu.memory_space<vmem>>, vector<1x4x1x32xf32>
    %113 = vector.shape_cast %112 : vector<1x4x1x32xf32> to vector<4x32xf32>
    %114 = vector.shape_cast %111 : vector<4x32xf32> to vector<1x4x1x32xf32>
    tpu.vector_store %arg7[%c0_72, %c0_73, %c15, %c0_74], %114 {strides = array<i32>} : memref<1x4x16x32xf32, #tpu.memory_space<vmem>>, vector<1x4x1x32xf32>,
    return
  }
  func.func @transform_0(%arg0: i32, %arg1: i32) -> (i32, i32, i32) {
    %c0_i32 = arith.constant 0 : i32
    %c0_i32_0 = arith.constant 0 : i32
    return %arg0, %c0_i32, %arg1 : i32, i32, i32
  }
  func.func @transform_1(%arg0: i32, %arg1: i32) -> (i32, i32) {
    %c0_i32 = arith.constant 0 : i32
    %c0_i32_0 = arith.constant 0 : i32
    %c0_i32_1 = arith.constant 0 : i32
    return %c0_i32, %c0_i32_0 : i32, i32
  }
  func.func @transform_2(%arg0: i32, %arg1: i32) -> (i32, i32) {
    %c0_i32 = arith.constant 0 : i32
    %c0_i32_0 = arith.constant 0 : i32
    %c0_i32_1 = arith.constant 0 : i32
    return %c0_i32, %c0_i32_0 : i32, i32
  }
  func.func @transform_3(%arg0: i32, %arg1: i32) -> (i32, i32) {
    %c0_i32 = arith.constant 0 : i32
    %c0_i32_0 = arith.constant 0 : i32
    %c0_i32_1 = arith.constant 0 : i32
    return %c0_i32, %c0_i32_0 : i32, i32
  }
  func.func @transform_4(%arg0: i32, %arg1: i32) -> (i32, i32) {
    %c0_i32 = arith.constant 0 : i32
    %c0_i32_0 = arith.constant 0 : i32
    %c0_i32_1 = arith.constant 0 : i32
    return %c0_i32, %c0_i32_0 : i32, i32
  }
  func.func @transform_5(%arg0: i32, %arg1: i32) -> (i32, i32, i32, i32) {
    %c0_i32 = arith.constant 0 : i32
    %c0_i32_0 = arith.constant 0 : i32
    %c0_i32_1 = arith.constant 0 : i32
    return %arg0, %c0_i32, %arg1, %c0_i32_0 : i32, i32, i32, i32
  }
}

</mosaic_0001>

<llo_original>
// kernel: tpu_custom_call.1
$region0: #{tpu_custom_call.1}
  #allocation0 [shape = 'u32[]', space=smem, size = 0x4, offset = 0x4, fixed_abs, tag = 'smem constant byte address 0x4 - core index']
  #allocation1 [shape = 'u32[144,128]{1,0:T(1,128)}', space=vmem, size = 0x12000, scoped, tag = 'internal scratch']
  #allocation6 [shape = 's32[]', space=sflag, size = 0x4, offset = 0, fixed_abs, tag = 'sflag constant byte address 0x0 - dummy sync flag']
  %s0 = inlined_call_operand.vmem [shape: f32[2,8,256], index: 0, kind: input, shape index: {}]
  %s1 = inlined_call_operand.vmem [shape: f32[16,8], index: 1, kind: input, shape index: {}]
  %s2 = inlined_call_operand.vmem [shape: f32[16,1], index: 2, kind: input, shape index: {}]
  %s3 = inlined_call_operand.hbm [shape: f32[16,32], index: 3, kind: input, shape index: {}]
  %s4 = inlined_call_operand.vmem [shape: f32[16,32], index: 4, kind: input, shape index: {}]
  %s5 = inlined_call_operand.hbm [shape: f32[2,4,32,32], index: 5, kind: output, shape index: {}]
  %s6 = sld [smem:[#allocation0]]
  $region57: #{tpu_custom_call.1} parent=0
    _
  %s8 = ssub.s32 1, %s6
  %s9 = scalar_select 0, %s8, %s6
  $region1: #{tpu_custom_call.1} parent=0
    #allocation2 [shape = 'u8[8192]{0}', space=vmem, size = 0x2000, scoped, tag = 'input window, operand 3, single buffered']
    #allocation3 [shape = 's32[2]{0}', space=sflag, size = 0x8, scoped, tag = 'scoped memory for tpu_custom_call.1']
    #allocation4 [shape = 's32[2]{0}', space=sflag, size = 0x8, scoped, tag = 'scoped memory for tpu_custom_call.1']
    #allocation5 [shape = 'u8[65536]{0}', space=vmem, size = 0x10000, scoped, tag = 'output window, operand 0']
    %10 = vsyncpa [#allocation3], 0
    %11 = vsyncpa [#allocation4], 0
    %s12 = scalar_lea.sflag [#allocation4], 1
    %13 = vsyncpa %s12, 0
    loop: start=0, step=1, limit=6
    $region2: #{tpu_custom_call.1} parent=1 // loop_pre_header
      _
    $region3: #{tpu_custom_call.1} parent=1 // loop_header
      %s15 = sphi 0, %s19
      %p16 = scmp.ge.s32.totalorder %s15, 6
      %s22 = sphi 0, %s34
      %s23 = sphi 0, %s30
      %s24 = sphi 0, %s22
      %s25 = sphi 0, %s23
      %s26 = sphi 0, %s24
      %s27 = sphi 0, %s25
      %s39 = sphi 0, %s41
      %s42 = sphi 0, %s39
      %s43 = sphi 0, %s42
      %s59 = sphi 0, %s43
      %s63 = sphi 0, %s63
      %s65 = sphi 0, %s63
      %s66 = sphi 0, %s65
      %s80 = sphi 0, %s66
      %s84 = sphi 0, %s84
      %s86 = sphi 0, %s84
      %s87 = sphi 0, %s86
      %s101 = sphi 0, %s87
      %s105 = sphi 0, %s105
      %s107 = sphi 0, %s105
      %s108 = sphi 0, %s107
      %s122 = sphi 0, %s108
      %s126 = sphi 0, %s126
      %s128 = sphi 0, %s126
      %s129 = sphi 0, %s128
      %s143 = sphi 0, %s129
      %s151 = sphi 0, %s153
      %s154 = sphi 0, %s151
      %s155 = sphi 0, %s154
      %s171 = sphi 0, %s155
    $region4: #{tpu_custom_call.1} parent=1 // loop_header_branch
      %18 = sbr.rel (%p16) target = $region8
    $region5: #{tpu_custom_call.1} parent=1 // loop_body
      %s20 = ssub.s32 %s15, 1
      %s21 = ssub.s32 %s15, 2
      %s28 = sadd.s32 1, %s23
      %p29 = scmp.ge.s32.totalorder %s28, 2
      %s30 = scalar_select %p29, 0, %s28
      %s31 = sadd.s32 1, %s22
      %s32 = scalar_select %p29, %s31, %s22
      %p33 = scmp.ge.s32.totalorder %s32, 2
      %s34 = scalar_select %p33, 0, %s32
      %s35 = ssub.s32 %s22, %s34
      %s36 = ssub.s32 %s23, %s30
      %s37 = sor.u32 %s35, %s36
      %p38 = scmp.eq.s32.totalorder %s37, 0
      %s40 = sadd.s32 %s39, 1
      %s41 = scalar_select %p38, %s39, %s40
      %p44 = pneg %p38
      %p45 = scmp.eq.s32.totalorder %s15, 3
      %p46 = por %p44, %p45
      %p47 = scmp.ne.s32.totalorder %s39, %s42
      %p48 = scmp.eq.s32.totalorder %s15, 0
      %p49 = por %p47, %p48
      %p50 = scmp.ne.s32.totalorder %s39, %s42
      %p51 = scmp.eq.s32.totalorder %s20, 3
      %p52 = por %p50, %p51
      %p53 = scmp.ne.s32.totalorder %s42, %s43
      %p54 = scmp.eq.s32.totalorder %s20, 0
      %p55 = por %p53, %p54
      %p56 = scmp.ne.s32.totalorder %s42, %s43
      %p57 = scmp.eq.s32.totalorder %s21, 3
      %p58 = por %p56, %p57
      %p60 = scmp.ne.s32.totalorder %s43, %s59
      %p61 = scmp.eq.s32.totalorder %s21, 0
      %p62 = por %p60, %p61
      %s64 = sadd.s32 %s63, 1
      %p67 = scmp.eq.s32.totalorder %s15, 3
      %p68 = scmp.ne.s32.totalorder %s63, %s65
      %p69 = scmp.eq.s32.totalorder %s15, 0
      %p70 = por %p68, %p69
      %p71 = scmp.ne.s32.totalorder %s63, %s65
      %p72 = scmp.eq.s32.totalorder %s20, 3
      %p73 = por %p71, %p72
      %p74 = scmp.ne.s32.totalorder %s65, %s66
      %p75 = scmp.eq.s32.totalorder %s20, 0
      %p76 = por %p74, %p75
      %p77 = scmp.ne.s32.totalorder %s65, %s66
      %p78 = scmp.eq.s32.totalorder %s21, 3
      %p79 = por %p77, %p78
      %p81 = scmp.ne.s32.totalorder %s66, %s80
      %p82 = scmp.eq.s32.totalorder %s21, 0
      %p83 = por %p81, %p82
      %s85 = sadd.s32 %s84, 1
      %p88 = scmp.eq.s32.totalorder %s15, 3
      %p89 = scmp.ne.s32.totalorder %s84, %s86
      %p90 = scmp.eq.s32.totalorder %s15, 0
      %p91 = por %p89, %p90
      %p92 = scmp.ne.s32.totalorder %s84, %s86
      %p93 = scmp.eq.s32.totalorder %s20, 3
      %p94 = por %p92, %p93
      %p95 = scmp.ne.s32.totalorder %s86, %s87
      %p96 = scmp.eq.s32.totalorder %s20, 0
      %p97 = por %p95, %p96
      %p98 = scmp.ne.s32.totalorder %s86, %s87
      %p99 = scmp.eq.s32.totalorder %s21, 3
      %p100 = por %p98, %p99
      %p102 = scmp.ne.s32.totalorder %s87, %s101
      %p103 = scmp.eq.s32.totalorder %s21, 0
      %p104 = por %p102, %p103
      %s106 = sadd.s32 %s105, 1
      %p109 = scmp.eq.s32.totalorder %s15, 3
      %p110 = scmp.ne.s32.totalorder %s105, %s107
      %p111 = scmp.eq.s32.totalorder %s15, 0
      %p112 = por %p110, %p111
      %p113 = scmp.ne.s32.totalorder %s105, %s107
      %p114 = scmp.eq.s32.totalorder %s20, 3
      %p115 = por %p113, %p114
      %p116 = scmp.ne.s32.totalorder %s107, %s108
      %p117 = scmp.eq.s32.totalorder %s20, 0
      %p118 = por %p116, %p117
      %p119 = scmp.ne.s32.totalorder %s107, %s108
      %p120 = scmp.eq.s32.totalorder %s21, 3
      %p121 = por %p119, %p120
      %p123 = scmp.ne.s32.totalorder %s108, %s122
      %p124 = scmp.eq.s32.totalorder %s21, 0
      %p125 = por %p123, %p124
      %s127 = sadd.s32 %s126, 1
      %p130 = scmp.eq.s32.totalorder %s15, 3
      %p131 = scmp.ne.s32.totalorder %s126, %s128
      %p132 = scmp.eq.s32.totalorder %s15, 0
      %p133 = por %p131, %p132
      %p134 = scmp.ne.s32.totalorder %s126, %s128
      %p135 = scmp.eq.s32.totalorder %s20, 3
      %p136 = por %p134, %p135
      %p137 = scmp.ne.s32.totalorder %s128, %s129
      %p138 = scmp.eq.s32.totalorder %s20, 0
      %p139 = por %p137, %p138
      %p140 = scmp.ne.s32.totalorder %s128, %s129
      %p141 = scmp.eq.s32.totalorder %s21, 3
      %p142 = por %p140, %p141
      %p144 = scmp.ne.s32.totalorder %s129, %s143
      %p145 = scmp.eq.s32.totalorder %s21, 0
      %p146 = por %p144, %p145
      %s147 = ssub.s32 %s22, %s34
      %s148 = ssub.s32 %s23, %s30
      %s149 = sor.u32 %s147, %s148
      %p150 = scmp.eq.s32.totalorder %s149, 0
      %s152 = sadd.s32 %s151, 1
      %s153 = scalar_select %p150, %s151, %s152
      %p156 = pneg %p150
      %p157 = scmp.eq.s32.totalorder %s15, 3
      %p158 = por %p156, %p157
      %p159 = scmp.ne.s32.totalorder %s151, %s154
      %p160 = scmp.eq.s32.totalorder %s15, 0
      %p161 = por %p159, %p160
      %p162 = scmp.ne.s32.totalorder %s151, %s154
      %p163 = scmp.eq.s32.totalorder %s20, 3
      %p164 = por %p162, %p163
      %p165 = scmp.ne.s32.totalorder %s154, %s155
      %p166 = scmp.eq.s32.totalorder %s20, 0
      %p167 = por %p165, %p166
      %p168 = scmp.ne.s32.totalorder %s154, %s155
      %p169 = scmp.eq.s32.totalorder %s21, 3
      %p170 = por %p168, %p169
      %p172 = scmp.ne.s32.totalorder %s155, %s171
      %p173 = scmp.eq.s32.totalorder %s21, 0
      %p174 = por %p172, %p173
      %p175 = scmp.le.s32.totalorder 1, %s15
      %p176 = scmp.lt.s32.totalorder %s15, 5
      %p177 = pnand %p175, %p176
      %p178 = pneg %p177
      // Predicated region
      $region9: #{tpu_custom_call.1} parent=5 // pred_check
        _
      $region10: #{tpu_custom_call.1} parent=5 // pred_check_branch
        %180 = sbr.rel (%p177) target = $region12
      $region11: #{tpu_custom_call.1} parent=5 // pred_region
        %s181 = ssub.s32 %s15, 1
        // Predicated region
        $region13: #{tpu_custom_call.1} parent=11 // pred_check
          %p182 = pneg %p76
        $region14: #{tpu_custom_call.1} parent=11 // pred_check_branch
          %184 = sbr.rel (%p182) target = $region16
        $region15: #{tpu_custom_call.1} parent=11 // pred_region
          _
        $region16: #{tpu_custom_call.1} parent=11 // pred_fallthru
          _
        // Predicated region
        $region17: #{tpu_custom_call.1} parent=11 // pred_check
          %p185 = pneg %p97
        $region18: #{tpu_custom_call.1} parent=11 // pred_check_branch
          %187 = sbr.rel (%p185) target = $region20
        $region19: #{tpu_custom_call.1} parent=11 // pred_region
          _
        $region20: #{tpu_custom_call.1} parent=11 // pred_fallthru
          _
        // Predicated region
        $region21: #{tpu_custom_call.1} parent=11 // pred_check
          %p188 = pneg %p118
        $region22: #{tpu_custom_call.1} parent=11 // pred_check_branch
          %190 = sbr.rel (%p188) target = $region24
        $region23: #{tpu_custom_call.1} parent=11 // pred_region
          %s192 = ssub.s32 256, 256
          %193 = vsyncadd [#allocation3], %s192
          %s194 = sshll.u32 [#allocation2], 4
          %s195 = int_to_ptr.vmem [resolvable:$true] %s194
          %200 = dma.hbm_to_vmem [thread:$0]  %s3, 256, %s195, [#allocation3], 128, 128, 8
        $region24: #{tpu_custom_call.1} parent=11 // pred_fallthru
          _
        // Predicated region
        $region25: #{tpu_custom_call.1} parent=11 // pred_check
          %p201 = pneg %p139
        $region26: #{tpu_custom_call.1} parent=11 // pred_check_branch
          %203 = sbr.rel (%p201) target = $region28
        $region27: #{tpu_custom_call.1} parent=11 // pred_region
          _
        $region28: #{tpu_custom_call.1} parent=11 // pred_fallthru
          _
      $region12: #{tpu_custom_call.1} parent=5 // pred_fallthru
        _
      %p204 = scmp.lt.s32.totalorder %s15, 4
      // Predicated region
      $region29: #{tpu_custom_call.1} parent=5 // pred_check
        %p205 = pneg %p204
      $region30: #{tpu_custom_call.1} parent=5 // pred_check_branch
        %207 = sbr.rel (%p205) target = $region32
      $region31: #{tpu_custom_call.1} parent=5 // pred_region
        // Predicated region
        $region33: #{tpu_custom_call.1} parent=31 // pred_check
          %p208 = pneg %p49
        $region34: #{tpu_custom_call.1} parent=31 // pred_check_branch
          %210 = sbr.rel (%p208) target = $region36
        $region35: #{tpu_custom_call.1} parent=31 // pred_region
          %p211 = scmp.lt.s32.totalorder %s22, 1
          %s212 = scalar_select %p211, %s22, 1
          %p213 = scmp.lt.s32.totalorder %s23, 1
          %s214 = scalar_select %p213, %s23, 1
          %s215 = smul.addr %s212, 2
          %s216 = sadd.s32 %s214, %s215
          %s217 = smul.addr %s216, 8
          %s218 = scalar_lea.vmem %s0, %s217
        $region36: #{tpu_custom_call.1} parent=31 // pred_fallthru
          _
      $region32: #{tpu_custom_call.1} parent=5 // pred_fallthru
        _
      %p219 = scmp.le.s32.totalorder 1, %s15
      %p220 = scmp.lt.s32.totalorder %s15, 5
      %p221 = pnand %p219, %p220
      %p222 = pneg %p221
      // Predicated region
      $region37: #{tpu_custom_call.1} parent=5 // pred_check
        _
      $region38: #{tpu_custom_call.1} parent=5 // pred_check_branch
        %224 = sbr.rel (%p221) target = $region40
      $region39: #{tpu_custom_call.1} parent=5 // pred_region
        %s225 = ssub.s32 %s15, 1
        // Predicated region
        $region41: #{tpu_custom_call.1} parent=39 // pred_check
          %p226 = pneg %p118
        $region42: #{tpu_custom_call.1} parent=39 // pred_check_branch
          %228 = sbr.rel (%p226) target = $region44
        $region43: #{tpu_custom_call.1} parent=39 // pred_region
          %229 = dma.done [#allocation3], 256
        $region44: #{tpu_custom_call.1} parent=39 // pred_fallthru
          _
        %p230 = scmp.lt.s32.totalorder %s24, 1
        %s231 = scalar_select %p230, %s24, 1
        %p232 = scmp.lt.s32.totalorder %s25, 1
        %s233 = scalar_select %p232, %s25, 1
        %s234 = smul.addr %s231, 2
        %s235 = sadd.s32 %s233, %s234
        %s236 = smul.addr %s235, 8
        %s237 = scalar_lea.vmem %s0, %s236
        %p238 = pneg %p55
        %p239 = pneg %p52
        %p240 = pneg %p76
        %p241 = pneg %p73
        %p242 = pneg %p97
        %p243 = pneg %p94
        %p244 = pneg %p118
        %p245 = pneg %p115
        %p246 = pneg %p139
        %p247 = pneg %p136
        %p248 = pneg %p167
        %p249 = pneg %p164
        %s250 = sand.u32 %s154, 1
        %s251 = scalar_lea.sflag [#allocation4], %s250
        %s252 = sand.u32 %s154, 1
        %s253 = smul.addr %s252, 64
        %s254 = scalar_lea.vmem [#allocation5], %s253
        %p255 = scmp.lt.s32.totalorder %s24, 1
        %s256 = scalar_select %p255, %s24, 1
        %p257 = scmp.lt.s32.totalorder %s25, 1
        %s258 = scalar_select %p257, %s25, 1
        %s259 = smul.addr %s256, 2
        %s260 = sadd.s32 %s258, %s259
        %s261 = smul.addr %s260, 8
        %s262 = scalar_lea.vmem %s0, %s261
        %s263 = smul.u32 2, %s25
        %v264 = vld [vmem:[%s1] sm:$0xff]
        %v265 = vld [vmem:[%s1 + $0x8] sm:$0xff]
        %v266 = vld [vmem:[%s262] sm:$0xff]
        %v267 = vld [vmem:[%s2] sm:$0xff]
        %v268 = vld [vmem:[%s2 + $0x8] sm:$0xff]
        %270 = vset.pattern.permute.xlu0 0
        %271 = vperm.xlu0 %270, %v267
        %v272 = vpop.permute.xlu0 %271
        %275 = vset.pattern.permute.xlu0 0
        %276 = vperm.xlu0 %275, %v268
        %v277 = vpop.permute.xlu0 %276
        %vm279 = vcmask 64512
        %v281 = vsel %vm279, %v264, 0
        %v284 = vsel %vm279, %v265, 0
        %286 = vmatprep.subr.mxu0 0.0
        %287 = vmatpush1.msra.mxu0 0.0
        %288 = vmatprep.subr.mxu0 0.0
        %289 = vmatpush1.msra.mxu0 0.0
        %290 = vmatprep.subr.mxu0 0.0
        %291 = vmatpush1.msra.mxu0 0.0
        %292 = vmatprep.subr.mxu0 0.0
        %293 = vmatpush1.msra.mxu0 0.0
        %294 = vmatprep.subr.mxu0 0.0
        %295 = vmatpush1.msra.mxu0 0.0
        %296 = vmatprep.subr.mxu0 0.0
        %297 = vmatpush1.msra.mxu0 0.0
        %298 = vmatprep.subr.mxu0 0.0
        %299 = vmatpush1.msra.mxu0 0.0
        %300 = vmatprep.subr.mxu0 0.0
        %301 = vmatpush1.msra.mxu0 0.0
        %302 = vmatprep.subr.mxu0 0.0
        %303 = vmatpush1.msra.mxu0 0.0
        %304 = vmatprep.subr.mxu0 0.0
        %305 = vmatpush1.msra.mxu0 0.0
        %306 = vmatprep.subr.mxu0 0.0
        %307 = vmatpush1.msra.mxu0 0.0
        %308 = vmatprep.subr.mxu0 0.0
        %309 = vmatpush1.msra.mxu0 0.0
        %310 = vmatprep.subr.mxu0 0.0
        %311 = vmatpush1.msra.mxu0 0.0
        %312 = vmatprep.subr.mxu0 0.0
        %313 = vmatpush1.msra.mxu0 0.0
        %314 = vmatprep.subr.mxu0 0.0
        %315 = vmatpush1.msra.mxu0 0.0
        %316 = vmatprep.subr.mxu0 0.0
        %317 = vmatpush1.msra.mxu0 %v266
        %318 = vmatprep.subr.mxu0 0.0
        %319 = vmatpush2.msra.mxu0 0.0
        %320 = vmatprep.subr.mxu0 0.0
        %321 = vmatpush2.msra.mxu0 0.0
        %322 = vmatprep.subr.mxu0 0.0
        %323 = vmatpush2.msra.mxu0 0.0
        %324 = vmatprep.subr.mxu0 0.0
        %325 = vmatpush2.msra.mxu0 0.0
        %326 = vmatprep.subr.mxu0 0.0
        %327 = vmatpush2.msra.mxu0 0.0
        %328 = vmatprep.subr.mxu0 0.0
        %329 = vmatpush2.msra.mxu0 0.0
        %330 = vmatprep.subr.mxu0 0.0
        %331 = vmatpush2.msra.mxu0 0.0
        %332 = vmatprep.subr.mxu0 0.0
        %333 = vmatpush2.msra.mxu0 0.0
        %334 = vmatprep.subr.mxu0 0.0
        %335 = vmatpush2.msra.mxu0 0.0
        %336 = vmatprep.subr.mxu0 0.0
        %337 = vmatpush2.msra.mxu0 0.0
        %338 = vmatprep.subr.mxu0 0.0
        %339 = vmatpush2.msra.mxu0 0.0
        %340 = vmatprep.subr.mxu0 0.0
        %341 = vmatpush2.msra.mxu0 0.0
        %342 = vmatprep.subr.mxu0 0.0
        %343 = vmatpush2.msra.mxu0 0.0
        %344 = vmatprep.subr.mxu0 0.0
        %345 = vmatpush2.msra.mxu0 0.0
        %346 = vmatprep.subr.mxu0 0.0
        %347 = vmatpush2.msra.mxu0 0.0
        %348 = vmatprep.subr.mxu0 0.0
        %349 = vmatpush2.msra.mxu0 0.0
        %350 = vmatprep.mubr.f32.mxu0 0.0
        %351 = vmatmul.mubr.f32.gmra.mxu0 %v281
        %v352 = vpop.f32.mrf.mxu0
        %v353 = vadd.f32 %v272, %v352
        %v354 = vpop.f32.mrf.mxu0
        %355 = vmatprep.mubr.f32.mxu0 0.0
        %356 = vmatmul.mubr.f32.gmra.mxu0 %v284
        %v357 = vpop.f32.mrf.mxu0
        %v358 = vadd.f32 %v277, %v357
        %v359 = vpop.f32.mrf.mxu0
        %360 = vdwg.mxu0
        %v361 = vld [vmem:[#allocation2] sm:$0xff]
        %v362 = vld [vmem:[#allocation2 + $0x8] sm:$0xff]
        %v363 = vld [vmem:[%s4] sm:$0xff]
        %v364 = vld [vmem:[%s4 + $0x8] sm:$0xff]
        %vm365 = vcmask 130048
        %v367 = vsel %vm365, %v358, 0
        %369 = vmatprep.subr.mxu0 0.0
        %370 = vmatpush1.msra.mxu0 0.0
        %371 = vmatprep.subr.mxu0 0.0
        %372 = vmatpush1.msra.mxu0 0.0
        %373 = vmatprep.subr.mxu0 0.0
        %374 = vmatpush1.msra.mxu0 0.0
        %375 = vmatprep.subr.mxu0 0.0
        %376 = vmatpush1.msra.mxu0 0.0
        %377 = vmatprep.subr.mxu0 0.0
        %378 = vmatpush1.msra.mxu0 0.0
        %379 = vmatprep.subr.mxu0 0.0
        %380 = vmatpush1.msra.mxu0 0.0
        %381 = vmatprep.subr.mxu0 0.0
        %382 = vmatpush1.msra.mxu0 0.0
        %383 = vmatprep.subr.mxu0 0.0
        %384 = vmatpush1.msra.mxu0 0.0
        %385 = vmatprep.subr.mxu0 0.0
        %386 = vmatpush1.msra.mxu0 0.0
        %387 = vmatprep.subr.mxu0 0.0
        %388 = vmatpush1.msra.mxu0 0.0
        %389 = vmatprep.subr.mxu0 0.0
        %390 = vmatpush1.msra.mxu0 0.0
        %391 = vmatprep.subr.mxu0 0.0
        %392 = vmatpush1.msra.mxu0 0.0
        %393 = vmatprep.subr.mxu0 0.0
        %394 = vmatpush1.msra.mxu0 0.0
        %395 = vmatprep.subr.mxu0 0.0
        %396 = vmatpush1.msra.mxu0 0.0
        %397 = vmatprep.subr.mxu0 0.0
        %398 = vmatpush1.msra.mxu0 %v364
        %399 = vmatprep.subr.mxu0 0.0
        %400 = vmatpush1.msra.mxu0 %v363
        %401 = vmatprep.subr.mxu0 0.0
        %402 = vmatpush2.msra.mxu0 0.0
        %403 = vmatprep.subr.mxu0 0.0
        %404 = vmatpush2.msra.mxu0 0.0
        %405 = vmatprep.subr.mxu0 0.0
        %406 = vmatpush2.msra.mxu0 0.0
        %407 = vmatprep.subr.mxu0 0.0
        %408 = vmatpush2.msra.mxu0 0.0
        %409 = vmatprep.subr.mxu0 0.0
        %410 = vmatpush2.msra.mxu0 0.0
        %411 = vmatprep.subr.mxu0 0.0
        %412 = vmatpush2.msra.mxu0 0.0
        %413 = vmatprep.subr.mxu0 0.0
        %414 = vmatpush2.msra.mxu0 0.0
        %415 = vmatprep.subr.mxu0 0.0
        %416 = vmatpush2.msra.mxu0 0.0
        %417 = vmatprep.subr.mxu0 0.0
        %418 = vmatpush2.msra.mxu0 0.0
        %419 = vmatprep.subr.mxu0 0.0
        %420 = vmatpush2.msra.mxu0 0.0
        %421 = vmatprep.subr.mxu0 0.0
        %422 = vmatpush2.msra.mxu0 0.0
        %423 = vmatprep.subr.mxu0 0.0
        %424 = vmatpush2.msra.mxu0 0.0
        %425 = vmatprep.subr.mxu0 0.0
        %426 = vmatpush2.msra.mxu0 0.0
        %427 = vmatprep.subr.mxu0 0.0
        %428 = vmatpush2.msra.mxu0 0.0
        %429 = vmatprep.subr.mxu0 0.0
        %430 = vmatpush2.msra.mxu0 0.0
        %431 = vmatprep.subr.mxu0 0.0
        %432 = vmatpush2.msra.mxu0 0.0
        %433 = vmatprep.mubr.f32.mxu0 0.0
        %434 = vmatmul.mubr.f32.gmra.mxu0 %v367
        %v435 = vpop.f32.mrf.mxu0
        %v436 = vadd.f32 0.0, %v435
        %v437 = vpop.f32.mrf.mxu0
        %438 = vdwg.mxu0
        %v440 = vsel %vm365, %v353, 0
        %442 = vmatprep.subr.mxu0 0.0
        %443 = vmatpush1.msra.mxu0 0.0
        %444 = vmatprep.subr.mxu0 0.0
        %445 = vmatpush1.msra.mxu0 0.0
        %446 = vmatprep.subr.mxu0 0.0
        %447 = vmatpush1.msra.mxu0 0.0
        %448 = vmatprep.subr.mxu0 0.0
        %449 = vmatpush1.msra.mxu0 0.0
        %450 = vmatprep.subr.mxu0 0.0
        %451 = vmatpush1.msra.mxu0 0.0
        %452 = vmatprep.subr.mxu0 0.0
        %453 = vmatpush1.msra.mxu0 0.0
        %454 = vmatprep.subr.mxu0 0.0
        %455 = vmatpush1.msra.mxu0 0.0
        %456 = vmatprep.subr.mxu0 0.0
        %457 = vmatpush1.msra.mxu0 0.0
        %458 = vmatprep.subr.mxu0 0.0
        %459 = vmatpush1.msra.mxu0 0.0
        %460 = vmatprep.subr.mxu0 0.0
        %461 = vmatpush1.msra.mxu0 0.0
        %462 = vmatprep.subr.mxu0 0.0
        %463 = vmatpush1.msra.mxu0 0.0
        %464 = vmatprep.subr.mxu0 0.0
        %465 = vmatpush1.msra.mxu0 0.0
        %466 = vmatprep.subr.mxu0 0.0
        %467 = vmatpush1.msra.mxu0 0.0
        %468 = vmatprep.subr.mxu0 0.0
        %469 = vmatpush1.msra.mxu0 0.0
        %470 = vmatprep.subr.mxu0 0.0
        %471 = vmatpush1.msra.mxu0 %v362
        %472 = vmatprep.subr.mxu0 0.0
        %473 = vmatpush1.msra.mxu0 %v361
        %474 = vmatprep.subr.mxu0 0.0
        %475 = vmatpush2.msra.mxu0 0.0
        %476 = vmatprep.subr.mxu0 0.0
        %477 = vmatpush2.msra.mxu0 0.0
        %478 = vmatprep.subr.mxu0 0.0
        %479 = vmatpush2.msra.mxu0 0.0
        %480 = vmatprep.subr.mxu0 0.0
        %481 = vmatpush2.msra.mxu0 0.0
        %482 = vmatprep.subr.mxu0 0.0
        %483 = vmatpush2.msra.mxu0 0.0
        %484 = vmatprep.subr.mxu0 0.0
        %485 = vmatpush2.msra.mxu0 0.0
        %486 = vmatprep.subr.mxu0 0.0
        %487 = vmatpush2.msra.mxu0 0.0
        %488 = vmatprep.subr.mxu0 0.0
        %489 = vmatpush2.msra.mxu0 0.0
        %490 = vmatprep.subr.mxu0 0.0
        %491 = vmatpush2.msra.mxu0 0.0
        %492 = vmatprep.subr.mxu0 0.0
        %493 = vmatpush2.msra.mxu0 0.0
        %494 = vmatprep.subr.mxu0 0.0
        %495 = vmatpush2.msra.mxu0 0.0
        %496 = vmatprep.subr.mxu0 0.0
        %497 = vmatpush2.msra.mxu0 0.0
        %498 = vmatprep.subr.mxu0 0.0
        %499 = vmatpush2.msra.mxu0 0.0
        %500 = vmatprep.subr.mxu0 0.0
        %501 = vmatpush2.msra.mxu0 0.0
        %502 = vmatprep.subr.mxu0 0.0
        %503 = vmatpush2.msra.mxu0 0.0
        %504 = vmatprep.subr.mxu0 0.0
        %505 = vmatpush2.msra.mxu0 0.0
        %506 = vmatprep.mubr.f32.mxu0 0.0
        %507 = vmatmul.mubr.f32.gmra.mxu0 %v440
        %v508 = vpop.f32.mrf.mxu0
        %v509 = vadd.f32 %v436, %v508
        %v510 = vpop.f32.mrf.mxu0
        %511 = vdwg.mxu0
        %v514 = vunpack.c.l.s4 1966171168
        %v515 = vunpack.c.0.s8 %v514
        %v516 = vlaneseq
        %v517 = vshrl.u32 %v516, 7
        %v518 = vsub.s32 %v515, %v517
        %v519 = vrot.slane %v509, %v518
        %v520 = vcombine.high %v519, %v519
        %v522 = vunpack.c.l.s4 1966171168
        %v523 = vunpack.c.0.s8 %v522
        %v524 = vlaneseq
        %v525 = vshrl.u32 %v524, 7
        %v526 = vsub.s32 %v523, %v525
        %v527 = vrot.slane %v519, %v526
        %v529 = vunpack.c.l.s4 1966171168
        %v530 = vunpack.c.0.s8 %v529
        %v531 = vlaneseq
        %v532 = vshrl.u32 %v531, 7
        %v533 = vsub.s32 %v530, %v532
        %v534 = vrot.slane %v520, %v533
        %v535 = vcombine.high %v527, %v527
        %v536 = vcombine.high %v534, %v534
        %vm541 = vcmask 253952
        %542 = vst.msk [vmem:[%s254] sm:$0x1] %vm541, %v527
        %543 = vst.msk [vmem:[%s254 + $0x10] sm:$0x1] %vm541, %v534
        %544 = vst.msk [vmem:[%s254 + $0x20] sm:$0x1] %vm541, %v535
        %545 = vst.msk [vmem:[%s254 + $0x30] sm:$0x1] %vm541, %v536
        %v546 = vcombine.high %v509, %v509
        %v548 = vunpack.c.l.s4 1966171168
        %v549 = vunpack.c.0.s8 %v548
        %v550 = vlaneseq
        %v551 = vshrl.u32 %v550, 7
        %v552 = vsub.s32 %v549, %v551
        %v553 = vrot.slane %v546, %v552
        %v554 = vcombine.high %v553, %v553
        %v556 = vunpack.c.l.s4 1966171168
        %v557 = vunpack.c.0.s8 %v556
        %v558 = vlaneseq
        %v559 = vshrl.u32 %v558, 7
        %v560 = vsub.s32 %v557, %v559
        %v561 = vrot.slane %v553, %v560
        %v563 = vunpack.c.l.s4 1966171168
        %v564 = vunpack.c.0.s8 %v563
        %v565 = vlaneseq
        %v566 = vshrl.u32 %v565, 7
        %v567 = vsub.s32 %v564, %v566
        %v568 = vrot.slane %v554, %v567
        %v569 = vcombine.high %v561, %v561
        %v570 = vcombine.high %v568, %v568
        %575 = vst.msk [vmem:[%s254 + $0x1] sm:$0x1] %vm541, %v561
        %576 = vst.msk [vmem:[%s254 + $0x11] sm:$0x1] %vm541, %v568
        %577 = vst.msk [vmem:[%s254 + $0x21] sm:$0x1] %vm541, %v569
        %578 = vst.msk [vmem:[%s254 + $0x31] sm:$0x1] %vm541, %v570
        %579 = vrot.lane.b32.xlu0 %v358, 112
        %v580 = vpop.permute.xlu0 %579
        %v581 = vsel %vm365, %v580, 0
        %583 = vmatprep.subr.mxu0 0.0
        %584 = vmatpush1.msra.mxu0 0.0
        %585 = vmatprep.subr.mxu0 0.0
        %586 = vmatpush1.msra.mxu0 0.0
        %587 = vmatprep.subr.mxu0 0.0
        %588 = vmatpush1.msra.mxu0 0.0
        %589 = vmatprep.subr.mxu0 0.0
        %590 = vmatpush1.msra.mxu0 0.0
        %591 = vmatprep.subr.mxu0 0.0
        %592 = vmatpush1.msra.mxu0 0.0
        %593 = vmatprep.subr.mxu0 0.0
        %594 = vmatpush1.msra.mxu0 0.0
        %595 = vmatprep.subr.mxu0 0.0
        %596 = vmatpush1.msra.mxu0 0.0
        %597 = vmatprep.subr.mxu0 0.0
        %598 = vmatpush1.msra.mxu0 0.0
        %599 = vmatprep.subr.mxu0 0.0
        %600 = vmatpush1.msra.mxu0 0.0
        %601 = vmatprep.subr.mxu0 0.0
        %602 = vmatpush1.msra.mxu0 0.0
        %603 = vmatprep.subr.mxu0 0.0
        %604 = vmatpush1.msra.mxu0 0.0
        %605 = vmatprep.subr.mxu0 0.0
        %606 = vmatpush1.msra.mxu0 0.0
        %607 = vmatprep.subr.mxu0 0.0
        %608 = vmatpush1.msra.mxu0 0.0
        %609 = vmatprep.subr.mxu0 0.0
        %610 = vmatpush1.msra.mxu0 0.0
        %611 = vmatprep.subr.mxu0 0.0
        %612 = vmatpush1.msra.mxu0 %v364
        %613 = vmatprep.subr.mxu0 0.0
        %614 = vmatpush1.msra.mxu0 %v363
        %615 = vmatprep.subr.mxu0 0.0
        %616 = vmatpush2.msra.mxu0 0.0
        %617 = vmatprep.subr.mxu0 0.0
        %618 = vmatpush2.msra.mxu0 0.0
        %619 = vmatprep.subr.mxu0 0.0
        %620 = vmatpush2.msra.mxu0 0.0
        %621 = vmatprep.subr.mxu0 0.0
        %622 = vmatpush2.msra.mxu0 0.0
        %623 = vmatprep.subr.mxu0 0.0
        %624 = vmatpush2.msra.mxu0 0.0
        %625 = vmatprep.subr.mxu0 0.0
        %626 = vmatpush2.msra.mxu0 0.0
        %627 = vmatprep.subr.mxu0 0.0
        %628 = vmatpush2.msra.mxu0 0.0
        %629 = vmatprep.subr.mxu0 0.0
        %630 = vmatpush2.msra.mxu0 0.0
        %631 = vmatprep.subr.mxu0 0.0
        %632 = vmatpush2.msra.mxu0 0.0
        %633 = vmatprep.subr.mxu0 0.0
        %634 = vmatpush2.msra.mxu0 0.0
        %635 = vmatprep.subr.mxu0 0.0
        %636 = vmatpush2.msra.mxu0 0.0
        %637 = vmatprep.subr.mxu0 0.0
        %638 = vmatpush2.msra.mxu0 0.0
        %639 = vmatprep.subr.mxu0 0.0
        %640 = vmatpush2.msra.mxu0 0.0
        %641 = vmatprep.subr.mxu0 0.0
        %642 = vmatpush2.msra.mxu0 0.0
        %643 = vmatprep.subr.mxu0 0.0
        %644 = vmatpush2.msra.mxu0 0.0
        %645 = vmatprep.subr.mxu0 0.0
        %646 = vmatpush2.msra.mxu0 0.0
        %647 = vmatprep.mubr.f32.mxu0 0.0
        %648 = vmatmul.mubr.f32.gmra.mxu0 %v581
        %v649 = vpop.f32.mrf.mxu0
        %v650 = vadd.f32 0.0, %v649
        %v651 = vpop.f32.mrf.mxu0
        %652 = vdwg.mxu0
        %653 = vrot.lane.b32.xlu0 %v353, 112
        %v654 = vpop.permute.xlu0 %653
        %v655 = vsel %vm365, %v654, 0
        %657 = vmatprep.subr.mxu0 0.0
        %658 = vmatpush1.msra.mxu0 0.0
        %659 = vmatprep.subr.mxu0 0.0
        %660 = vmatpush1.msra.mxu0 0.0
        %661 = vmatprep.subr.mxu0 0.0
        %662 = vmatpush1.msra.mxu0 0.0
        %663 = vmatprep.subr.mxu0 0.0
        %664 = vmatpush1.msra.mxu0 0.0
        %665 = vmatprep.subr.mxu0 0.0
        %666 = vmatpush1.msra.mxu0 0.0
        %667 = vmatprep.subr.mxu0 0.0
        %668 = vmatpush1.msra.mxu0 0.0
        %669 = vmatprep.subr.mxu0 0.0
        %670 = vmatpush1.msra.mxu0 0.0
        %671 = vmatprep.subr.mxu0 0.0
        %672 = vmatpush1.msra.mxu0 0.0
        %673 = vmatprep.subr.mxu0 0.0
        %674 = vmatpush1.msra.mxu0 0.0
        %675 = vmatprep.subr.mxu0 0.0
        %676 = vmatpush1.msra.mxu0 0.0
        %677 = vmatprep.subr.mxu0 0.0
        %678 = vmatpush1.msra.mxu0 0.0
        %679 = vmatprep.subr.mxu0 0.0
        %680 = vmatpush1.msra.mxu0 0.0
        %681 = vmatprep.subr.mxu0 0.0
        %682 = vmatpush1.msra.mxu0 0.0
        %683 = vmatprep.subr.mxu0 0.0
        %684 = vmatpush1.msra.mxu0 0.0
        %685 = vmatprep.subr.mxu0 0.0
        %686 = vmatpush1.msra.mxu0 %v362
        %687 = vmatprep.subr.mxu0 0.0
        %688 = vmatpush1.msra.mxu0 %v361
        %689 = vmatprep.subr.mxu0 0.0
        %690 = vmatpush2.msra.mxu0 0.0
        %691 = vmatprep.subr.mxu0 0.0
        %692 = vmatpush2.msra.mxu0 0.0
        %693 = vmatprep.subr.mxu0 0.0
        %694 = vmatpush2.msra.mxu0 0.0
        %695 = vmatprep.subr.mxu0 0.0
        %696 = vmatpush2.msra.mxu0 0.0
        %697 = vmatprep.subr.mxu0 0.0
        %698 = vmatpush2.msra.mxu0 0.0
        %699 = vmatprep.subr.mxu0 0.0
        %700 = vmatpush2.msra.mxu0 0.0
        %701 = vmatprep.subr.mxu0 0.0
        %702 = vmatpush2.msra.mxu0 0.0
        %703 = vmatprep.subr.mxu0 0.0
        %704 = vmatpush2.msra.mxu0 0.0
        %705 = vmatprep.subr.mxu0 0.0
        %706 = vmatpush2.msra.mxu0 0.0
        %707 = vmatprep.subr.mxu0 0.0
        %708 = vmatpush2.msra.mxu0 0.0
        %709 = vmatprep.subr.mxu0 0.0
        %710 = vmatpush2.msra.mxu0 0.0
        %711 = vmatprep.subr.mxu0 0.0
        %712 = vmatpush2.msra.mxu0 0.0
        %713 = vmatprep.subr.mxu0 0.0
        %714 = vmatpush2.msra.mxu0 0.0
        %715 = vmatprep.subr.mxu0 0.0
        %716 = vmatpush2.msra.mxu0 0.0
        %717 = vmatprep.subr.mxu0 0.0
        %718 = vmatpush2.msra.mxu0 0.0
        %719 = vmatprep.subr.mxu0 0.0
        %720 = vmatpush2.msra.mxu0 0.0
        %721 = vmatprep.mubr.f32.mxu0 0.0
        %722 = vmatmul.mubr.f32.gmra.mxu0 %v655
        %v723 = vpop.f32.mrf.mxu0
        %v724 = vadd.f32 %v650, %v723
        %v725 = vpop.f32.mrf.mxu0
        %726 = vdwg.mxu0
        %v729 = vunpack.c.l.s4 1966171168
        %v730 = vunpack.c.0.s8 %v729
        %v731 = vlaneseq
        %v732 = vshrl.u32 %v731, 7
        %v733 = vsub.s32 %v730, %v732
        %v734 = vrot.slane %v724, %v733
        %v735 = vcombine.high %v734, %v734
        %v737 = vunpack.c.l.s4 1966171168
        %v738 = vunpack.c.0.s8 %v737
        %v739 = vlaneseq
        %v740 = vshrl.u32 %v739, 7
        %v741 = vsub.s32 %v738, %v740
        %v742 = vrot.slane %v734, %v741
        %v744 = vunpack.c.l.s4 1966171168
        %v745 = vunpack.c.0.s8 %v744
        %v746 = vlaneseq
        %v747 = vshrl.u32 %v746, 7
        %v748 = vsub.s32 %v745, %v747
        %v749 = vrot.slane %v735, %v748
        %v750 = vcombine.high %v742, %v742
        %v751 = vcombine.high %v749, %v749
        %756 = vst.msk [vmem:[%s254 + $0x2] sm:$0x1] %vm541, %v742
        %757 = vst.msk [vmem:[%s254 + $0x12] sm:$0x1] %vm541, %v749
        %758 = vst.msk [vmem:[%s254 + $0x22] sm:$0x1] %vm541, %v750
        %759 = vst.msk [vmem:[%s254 + $0x32] sm:$0x1] %vm541, %v751
        %v760 = vcombine.high %v724, %v724
        %v762 = vunpack.c.l.s4 1966171168
        %v763 = vunpack.c.0.s8 %v762
        %v764 = vlaneseq
        %v765 = vshrl.u32 %v764, 7
        %v766 = vsub.s32 %v763, %v765
        %v767 = vrot.slane %v760, %v766
        %v768 = vcombine.high %v767, %v767
        %v770 = vunpack.c.l.s4 1966171168
        %v771 = vunpack.c.0.s8 %v770
        %v772 = vlaneseq
        %v773 = vshrl.u32 %v772, 7
        %v774 = vsub.s32 %v771, %v773
        %v775 = vrot.slane %v767, %v774
        %v777 = vunpack.c.l.s4 1966171168
        %v778 = vunpack.c.0.s8 %v777
        %v779 = vlaneseq
        %v780 = vshrl.u32 %v779, 7
        %v781 = vsub.s32 %v778, %v780
        %v782 = vrot.slane %v768, %v781
        %v783 = vcombine.high %v775, %v775
        %v784 = vcombine.high %v782, %v782
        %789 = vst.msk [vmem:[%s254 + $0x3] sm:$0x1] %vm541, %v775
        %790 = vst.msk [vmem:[%s254 + $0x13] sm:$0x1] %vm541, %v782
        %791 = vst.msk [vmem:[%s254 + $0x23] sm:$0x1] %vm541, %v783
        %792 = vst.msk [vmem:[%s254 + $0x33] sm:$0x1] %vm541, %v784
        %793 = vrot.lane.b32.xlu0 %v358, 96
        %v794 = vpop.permute.xlu0 %793
        %v795 = vsel %vm365, %v794, 0
        %797 = vmatprep.subr.mxu0 0.0
        %798 = vmatpush1.msra.mxu0 0.0
        %799 = vmatprep.subr.mxu0 0.0
        %800 = vmatpush1.msra.mxu0 0.0
        %801 = vmatprep.subr.mxu0 0.0
        %802 = vmatpush1.msra.mxu0 0.0
        %803 = vmatprep.subr.mxu0 0.0
        %804 = vmatpush1.msra.mxu0 0.0
        %805 = vmatprep.subr.mxu0 0.0
        %806 = vmatpush1.msra.mxu0 0.0
        %807 = vmatprep.subr.mxu0 0.0
        %808 = vmatpush1.msra.mxu0 0.0
        %809 = vmatprep.subr.mxu0 0.0
        %810 = vmatpush1.msra.mxu0 0.0
        %811 = vmatprep.subr.mxu0 0.0
        %812 = vmatpush1.msra.mxu0 0.0
        %813 = vmatprep.subr.mxu0 0.0
        %814 = vmatpush1.msra.mxu0 0.0
        %815 = vmatprep.subr.mxu0 0.0
        %816 = vmatpush1.msra.mxu0 0.0
        %817 = vmatprep.subr.mxu0 0.0
        %818 = vmatpush1.msra.mxu0 0.0
        %819 = vmatprep.subr.mxu0 0.0
        %820 = vmatpush1.msra.mxu0 0.0
        %821 = vmatprep.subr.mxu0 0.0
        %822 = vmatpush1.msra.mxu0 0.0
        %823 = vmatprep.subr.mxu0 0.0
        %824 = vmatpush1.msra.mxu0 0.0
        %825 = vmatprep.subr.mxu0 0.0
        %826 = vmatpush1.msra.mxu0 %v364
        %827 = vmatprep.subr.mxu0 0.0
        %828 = vmatpush1.msra.mxu0 %v363
        %829 = vmatprep.subr.mxu0 0.0
        %830 = vmatpush2.msra.mxu0 0.0
        %831 = vmatprep.subr.mxu0 0.0
        %832 = vmatpush2.msra.mxu0 0.0
        %833 = vmatprep.subr.mxu0 0.0
        %834 = vmatpush2.msra.mxu0 0.0
        %835 = vmatprep.subr.mxu0 0.0
        %836 = vmatpush2.msra.mxu0 0.0
        %837 = vmatprep.subr.mxu0 0.0
        %838 = vmatpush2.msra.mxu0 0.0
        %839 = vmatprep.subr.mxu0 0.0
        %840 = vmatpush2.msra.mxu0 0.0
        %841 = vmatprep.subr.mxu0 0.0
        %842 = vmatpush2.msra.mxu0 0.0
        %843 = vmatprep.subr.mxu0 0.0
        %844 = vmatpush2.msra.mxu0 0.0
        %845 = vmatprep.subr.mxu0 0.0
        %846 = vmatpush2.msra.mxu0 0.0
        %847 = vmatprep.subr.mxu0 0.0
        %848 = vmatpush2.msra.mxu0 0.0
        %849 = vmatprep.subr.mxu0 0.0
        %850 = vmatpush2.msra.mxu0 0.0
        %851 = vmatprep.subr.mxu0 0.0
        %852 = vmatpush2.msra.mxu0 0.0
        %853 = vmatprep.subr.mxu0 0.0
        %854 = vmatpush2.msra.mxu0 0.0
        %855 = vmatprep.subr.mxu0 0.0
        %856 = vmatpush2.msra.mxu0 0.0
        %857 = vmatprep.subr.mxu0 0.0
        %858 = vmatpush2.msra.mxu0 0.0
        %859 = vmatprep.subr.mxu0 0.0
        %860 = vmatpush2.msra.mxu0 0.0
        %861 = vmatprep.mubr.f32.mxu0 0.0
        %862 = vmatmul.mubr.f32.gmra.mxu0 %v795
        %v863 = vpop.f32.mrf.mxu0
        %v864 = vadd.f32 0.0, %v863
        %v865 = vpop.f32.mrf.mxu0
        %866 = vdwg.mxu0
        %867 = vrot.lane.b32.xlu0 %v353, 96
        %v868 = vpop.permute.xlu0 %867
        %v869 = vsel %vm365, %v868, 0
        %871 = vmatprep.subr.mxu0 0.0
        %872 = vmatpush1.msra.mxu0 0.0
        %873 = vmatprep.subr.mxu0 0.0
        %874 = vmatpush1.msra.mxu0 0.0
        %875 = vmatprep.subr.mxu0 0.0
        %876 = vmatpush1.msra.mxu0 0.0
        %877 = vmatprep.subr.mxu0 0.0
        %878 = vmatpush1.msra.mxu0 0.0
        %879 = vmatprep.subr.mxu0 0.0
        %880 = vmatpush1.msra.mxu0 0.0
        %881 = vmatprep.subr.mxu0 0.0
        %882 = vmatpush1.msra.mxu0 0.0
        %883 = vmatprep.subr.mxu0 0.0
        %884 = vmatpush1.msra.mxu0 0.0
        %885 = vmatprep.subr.mxu0 0.0
        %886 = vmatpush1.msra.mxu0 0.0
        %887 = vmatprep.subr.mxu0 0.0
        %888 = vmatpush1.msra.mxu0 0.0
        %889 = vmatprep.subr.mxu0 0.0
        %890 = vmatpush1.msra.mxu0 0.0
        %891 = vmatprep.subr.mxu0 0.0
        %892 = vmatpush1.msra.mxu0 0.0
        %893 = vmatprep.subr.mxu0 0.0
        %894 = vmatpush1.msra.mxu0 0.0
        %895 = vmatprep.subr.mxu0 0.0
        %896 = vmatpush1.msra.mxu0 0.0
        %897 = vmatprep.subr.mxu0 0.0
        %898 = vmatpush1.msra.mxu0 0.0
        %899 = vmatprep.subr.mxu0 0.0
        %900 = vmatpush1.msra.mxu0 %v362
        %901 = vmatprep.subr.mxu0 0.0
        %902 = vmatpush1.msra.mxu0 %v361
        %903 = vmatprep.subr.mxu0 0.0
        %904 = vmatpush2.msra.mxu0 0.0
        %905 = vmatprep.subr.mxu0 0.0
        %906 = vmatpush2.msra.mxu0 0.0
        %907 = vmatprep.subr.mxu0 0.0
        %908 = vmatpush2.msra.mxu0 0.0
        %909 = vmatprep.subr.mxu0 0.0
        %910 = vmatpush2.msra.mxu0 0.0
        %911 = vmatprep.subr.mxu0 0.0
        %912 = vmatpush2.msra.mxu0 0.0
        %913 = vmatprep.subr.mxu0 0.0
        %914 = vmatpush2.msra.mxu0 0.0
        %915 = vmatprep.subr.mxu0 0.0
        %916 = vmatpush2.msra.mxu0 0.0
        %917 = vmatprep.subr.mxu0 0.0
        %918 = vmatpush2.msra.mxu0 0.0
        %919 = vmatprep.subr.mxu0 0.0
        %920 = vmatpush2.msra.mxu0 0.0
        %921 = vmatprep.subr.mxu0 0.0
        %922 = vmatpush2.msra.mxu0 0.0
        %923 = vmatprep.subr.mxu0 0.0
        %924 = vmatpush2.msra.mxu0 0.0
        %925 = vmatprep.subr.mxu0 0.0
        %926 = vmatpush2.msra.mxu0 0.0
        %927 = vmatprep.subr.mxu0 0.0
        %928 = vmatpush2.msra.mxu0 0.0
        %929 = vmatprep.subr.mxu0 0.0
        %930 = vmatpush2.msra.mxu0 0.0
        %931 = vmatprep.subr.mxu0 0.0
        %932 = vmatpush2.msra.mxu0 0.0
        %933 = vmatprep.subr.mxu0 0.0
        %934 = vmatpush2.msra.mxu0 0.0
        %935 = vmatprep.mubr.f32.mxu0 0.0
        %936 = vmatmul.mubr.f32.gmra.mxu0 %v869
        %v937 = vpop.f32.mrf.mxu0
        %v938 = vadd.f32 %v864, %v937
        %v939 = vpop.f32.mrf.mxu0
        %940 = vdwg.mxu0
        %v943 = vunpack.c.l.s4 1966171168
        %v944 = vunpack.c.0.s8 %v943
        %v945 = vlaneseq
        %v946 = vshrl.u32 %v945, 7
        %v947 = vsub.s32 %v944, %v946
        %v948 = vrot.slane %v938, %v947
        %v949 = vcombine.high %v948, %v948
        %v951 = vunpack.c.l.s4 1966171168
        %v952 = vunpack.c.0.s8 %v951
        %v953 = vlaneseq
        %v954 = vshrl.u32 %v953, 7
        %v955 = vsub.s32 %v952, %v954
        %v956 = vrot.slane %v948, %v955
        %v958 = vunpack.c.l.s4 1966171168
        %v959 = vunpack.c.0.s8 %v958
        %v960 = vlaneseq
        %v961 = vshrl.u32 %v960, 7
        %v962 = vsub.s32 %v959, %v961
        %v963 = vrot.slane %v949, %v962
        %v964 = vcombine.high %v956, %v956
        %v965 = vcombine.high %v963, %v963
        %970 = vst.msk [vmem:[%s254 + $0x4] sm:$0x1] %vm541, %v956
        %971 = vst.msk [vmem:[%s254 + $0x14] sm:$0x1] %vm541, %v963
        %972 = vst.msk [vmem:[%s254 + $0x24] sm:$0x1] %vm541, %v964
        %973 = vst.msk [vmem:[%s254 + $0x34] sm:$0x1] %vm541, %v965
        %v974 = vcombine.high %v938, %v938
        %v976 = vunpack.c.l.s4 1966171168
        %v977 = vunpack.c.0.s8 %v976
        %v978 = vlaneseq
        %v979 = vshrl.u32 %v978, 7
        %v980 = vsub.s32 %v977, %v979
        %v981 = vrot.slane %v974, %v980
        %v982 = vcombine.high %v981, %v981
        %v984 = vunpack.c.l.s4 1966171168
        %v985 = vunpack.c.0.s8 %v984
        %v986 = vlaneseq
        %v987 = vshrl.u32 %v986, 7
        %v988 = vsub.s32 %v985, %v987
        %v989 = vrot.slane %v981, %v988
        %v991 = vunpack.c.l.s4 1966171168
        %v992 = vunpack.c.0.s8 %v991
        %v993 = vlaneseq
        %v994 = vshrl.u32 %v993, 7
        %v995 = vsub.s32 %v992, %v994
        %v996 = vrot.slane %v982, %v995
        %v997 = vcombine.high %v989, %v989
        %v998 = vcombine.high %v996, %v996
        %1003 = vst.msk [vmem:[%s254 + $0x5] sm:$0x1] %vm541, %v989
        %1004 = vst.msk [vmem:[%s254 + $0x15] sm:$0x1] %vm541, %v996
        %1005 = vst.msk [vmem:[%s254 + $0x25] sm:$0x1] %vm541, %v997
        %1006 = vst.msk [vmem:[%s254 + $0x35] sm:$0x1] %vm541, %v998
        %1007 = vrot.lane.b32.xlu0 %v358, 80
        %v1008 = vpop.permute.xlu0 %1007
        %v1009 = vsel %vm365, %v1008, 0
        %1011 = vmatprep.subr.mxu0 0.0
        %1012 = vmatpush1.msra.mxu0 0.0
        %1013 = vmatprep.subr.mxu0 0.0
        %1014 = vmatpush1.msra.mxu0 0.0
        %1015 = vmatprep.subr.mxu0 0.0
        %1016 = vmatpush1.msra.mxu0 0.0
        %1017 = vmatprep.subr.mxu0 0.0
        %1018 = vmatpush1.msra.mxu0 0.0
        %1019 = vmatprep.subr.mxu0 0.0
        %1020 = vmatpush1.msra.mxu0 0.0
        %1021 = vmatprep.subr.mxu0 0.0
        %1022 = vmatpush1.msra.mxu0 0.0
        %1023 = vmatprep.subr.mxu0 0.0
        %1024 = vmatpush1.msra.mxu0 0.0
        %1025 = vmatprep.subr.mxu0 0.0
        %1026 = vmatpush1.msra.mxu0 0.0
        %1027 = vmatprep.subr.mxu0 0.0
        %1028 = vmatpush1.msra.mxu0 0.0
        %1029 = vmatprep.subr.mxu0 0.0
        %1030 = vmatpush1.msra.mxu0 0.0
        %1031 = vmatprep.subr.mxu0 0.0
        %1032 = vmatpush1.msra.mxu0 0.0
        %1033 = vmatprep.subr.mxu0 0.0
        %1034 = vmatpush1.msra.mxu0 0.0
        %1035 = vmatprep.subr.mxu0 0.0
        %1036 = vmatpush1.msra.mxu0 0.0
        %1037 = vmatprep.subr.mxu0 0.0
        %1038 = vmatpush1.msra.mxu0 0.0
        %1039 = vmatprep.subr.mxu0 0.0
        %1040 = vmatpush1.msra.mxu0 %v364
        %1041 = vmatprep.subr.mxu0 0.0
        %1042 = vmatpush1.msra.mxu0 %v363
        %1043 = vmatprep.subr.mxu0 0.0
        %1044 = vmatpush2.msra.mxu0 0.0
        %1045 = vmatprep.subr.mxu0 0.0
        %1046 = vmatpush2.msra.mxu0 0.0
        %1047 = vmatprep.subr.mxu0 0.0
        %1048 = vmatpush2.msra.mxu0 0.0
        %1049 = vmatprep.subr.mxu0 0.0
        %1050 = vmatpush2.msra.mxu0 0.0
        %1051 = vmatprep.subr.mxu0 0.0
        %1052 = vmatpush2.msra.mxu0 0.0
        %1053 = vmatprep.subr.mxu0 0.0
        %1054 = vmatpush2.msra.mxu0 0.0
        %1055 = vmatprep.subr.mxu0 0.0
        %1056 = vmatpush2.msra.mxu0 0.0
        %1057 = vmatprep.subr.mxu0 0.0
        %1058 = vmatpush2.msra.mxu0 0.0
        %1059 = vmatprep.subr.mxu0 0.0
        %1060 = vmatpush2.msra.mxu0 0.0
        %1061 = vmatprep.subr.mxu0 0.0
        %1062 = vmatpush2.msra.mxu0 0.0
        %1063 = vmatprep.subr.mxu0 0.0
        %1064 = vmatpush2.msra.mxu0 0.0
        %1065 = vmatprep.subr.mxu0 0.0
        %1066 = vmatpush2.msra.mxu0 0.0
        %1067 = vmatprep.subr.mxu0 0.0
        %1068 = vmatpush2.msra.mxu0 0.0
        %1069 = vmatprep.subr.mxu0 0.0
        %1070 = vmatpush2.msra.mxu0 0.0
        %1071 = vmatprep.subr.mxu0 0.0
        %1072 = vmatpush2.msra.mxu0 0.0
        %1073 = vmatprep.subr.mxu0 0.0
        %1074 = vmatpush2.msra.mxu0 0.0
        %1075 = vmatprep.mubr.f32.mxu0 0.0
        %1076 = vmatmul.mubr.f32.gmra.mxu0 %v1009
        %v1077 = vpop.f32.mrf.mxu0
        %v1078 = vadd.f32 0.0, %v1077
        %v1079 = vpop.f32.mrf.mxu0
        %1080 = vdwg.mxu0
        %1081 = vrot.lane.b32.xlu0 %v353, 80
        %v1082 = vpop.permute.xlu0 %1081
        %v1083 = vsel %vm365, %v1082, 0
        %1085 = vmatprep.subr.mxu0 0.0
        %1086 = vmatpush1.msra.mxu0 0.0
        %1087 = vmatprep.subr.mxu0 0.0
        %1088 = vmatpush1.msra.mxu0 0.0
        %1089 = vmatprep.subr.mxu0 0.0
        %1090 = vmatpush1.msra.mxu0 0.0
        %1091 = vmatprep.subr.mxu0 0.0
        %1092 = vmatpush1.msra.mxu0 0.0
        %1093 = vmatprep.subr.mxu0 0.0
        %1094 = vmatpush1.msra.mxu0 0.0
        %1095 = vmatprep.subr.mxu0 0.0
        %1096 = vmatpush1.msra.mxu0 0.0
        %1097 = vmatprep.subr.mxu0 0.0
        %1098 = vmatpush1.msra.mxu0 0.0
        %1099 = vmatprep.subr.mxu0 0.0
        %1100 = vmatpush1.msra.mxu0 0.0
        %1101 = vmatprep.subr.mxu0 0.0
        %1102 = vmatpush1.msra.mxu0 0.0
        %1103 = vmatprep.subr.mxu0 0.0
        %1104 = vmatpush1.msra.mxu0 0.0
        %1105 = vmatprep.subr.mxu0 0.0
        %1106 = vmatpush1.msra.mxu0 0.0
        %1107 = vmatprep.subr.mxu0 0.0
        %1108 = vmatpush1.msra.mxu0 0.0
        %1109 = vmatprep.subr.mxu0 0.0
        %1110 = vmatpush1.msra.mxu0 0.0
        %1111 = vmatprep.subr.mxu0 0.0
        %1112 = vmatpush1.msra.mxu0 0.0
        %1113 = vmatprep.subr.mxu0 0.0
        %1114 = vmatpush1.msra.mxu0 %v362
        %1115 = vmatprep.subr.mxu0 0.0
        %1116 = vmatpush1.msra.mxu0 %v361
        %1117 = vmatprep.subr.mxu0 0.0
        %1118 = vmatpush2.msra.mxu0 0.0
        %1119 = vmatprep.subr.mxu0 0.0
        %1120 = vmatpush2.msra.mxu0 0.0
        %1121 = vmatprep.subr.mxu0 0.0
        %1122 = vmatpush2.msra.mxu0 0.0
        %1123 = vmatprep.subr.mxu0 0.0
        %1124 = vmatpush2.msra.mxu0 0.0
        %1125 = vmatprep.subr.mxu0 0.0
        %1126 = vmatpush2.msra.mxu0 0.0
        %1127 = vmatprep.subr.mxu0 0.0
        %1128 = vmatpush2.msra.mxu0 0.0
        %1129 = vmatprep.subr.mxu0 0.0
        %1130 = vmatpush2.msra.mxu0 0.0
        %1131 = vmatprep.subr.mxu0 0.0
        %1132 = vmatpush2.msra.mxu0 0.0
        %1133 = vmatprep.subr.mxu0 0.0
        %1134 = vmatpush2.msra.mxu0 0.0
        %1135 = vmatprep.subr.mxu0 0.0
        %1136 = vmatpush2.msra.mxu0 0.0
        %1137 = vmatprep.subr.mxu0 0.0
        %1138 = vmatpush2.msra.mxu0 0.0
        %1139 = vmatprep.subr.mxu0 0.0
        %1140 = vmatpush2.msra.mxu0 0.0
        %1141 = vmatprep.subr.mxu0 0.0
        %1142 = vmatpush2.msra.mxu0 0.0
        %1143 = vmatprep.subr.mxu0 0.0
        %1144 = vmatpush2.msra.mxu0 0.0
        %1145 = vmatprep.subr.mxu0 0.0
        %1146 = vmatpush2.msra.mxu0 0.0
        %1147 = vmatprep.subr.mxu0 0.0
        %1148 = vmatpush2.msra.mxu0 0.0
        %1149 = vmatprep.mubr.f32.mxu0 0.0
        %1150 = vmatmul.mubr.f32.gmra.mxu0 %v1083
        %v1151 = vpop.f32.mrf.mxu0
        %v1152 = vadd.f32 %v1078, %v1151
        %v1153 = vpop.f32.mrf.mxu0
        %1154 = vdwg.mxu0
        %v1157 = vunpack.c.l.s4 1966171168
        %v1158 = vunpack.c.0.s8 %v1157
        %v1159 = vlaneseq
        %v1160 = vshrl.u32 %v1159, 7
        %v1161 = vsub.s32 %v1158, %v1160
        %v1162 = vrot.slane %v1152, %v1161
        %v1163 = vcombine.high %v1162, %v1162
        %v1165 = vunpack.c.l.s4 1966171168
        %v1166 = vunpack.c.0.s8 %v1165
        %v1167 = vlaneseq
        %v1168 = vshrl.u32 %v1167, 7
        %v1169 = vsub.s32 %v1166, %v1168
        %v1170 = vrot.slane %v1162, %v1169
        %v1172 = vunpack.c.l.s4 1966171168
        %v1173 = vunpack.c.0.s8 %v1172
        %v1174 = vlaneseq
        %v1175 = vshrl.u32 %v1174, 7
        %v1176 = vsub.s32 %v1173, %v1175
        %v1177 = vrot.slane %v1163, %v1176
        %v1178 = vcombine.high %v1170, %v1170
        %v1179 = vcombine.high %v1177, %v1177
        %1184 = vst.msk [vmem:[%s254 + $0x6] sm:$0x1] %vm541, %v1170
        %1185 = vst.msk [vmem:[%s254 + $0x16] sm:$0x1] %vm541, %v1177
        %1186 = vst.msk [vmem:[%s254 + $0x26] sm:$0x1] %vm541, %v1178
        %1187 = vst.msk [vmem:[%s254 + $0x36] sm:$0x1] %vm541, %v1179
        %v1188 = vcombine.high %v1152, %v1152
        %v1190 = vunpack.c.l.s4 1966171168
        %v1191 = vunpack.c.0.s8 %v1190
        %v1192 = vlaneseq
        %v1193 = vshrl.u32 %v1192, 7
        %v1194 = vsub.s32 %v1191, %v1193
        %v1195 = vrot.slane %v1188, %v1194
        %v1196 = vcombine.high %v1195, %v1195
        %v1198 = vunpack.c.l.s4 1966171168
        %v1199 = vunpack.c.0.s8 %v1198
        %v1200 = vlaneseq
        %v1201 = vshrl.u32 %v1200, 7
        %v1202 = vsub.s32 %v1199, %v1201
        %v1203 = vrot.slane %v1195, %v1202
        %v1205 = vunpack.c.l.s4 1966171168
        %v1206 = vunpack.c.0.s8 %v1205
        %v1207 = vlaneseq
        %v1208 = vshrl.u32 %v1207, 7
        %v1209 = vsub.s32 %v1206, %v1208
        %v1210 = vrot.slane %v1196, %v1209
        %v1211 = vcombine.high %v1203, %v1203
        %v1212 = vcombine.high %v1210, %v1210
        %1217 = vst.msk [vmem:[%s254 + $0x7] sm:$0x1] %vm541, %v1203
        %1218 = vst.msk [vmem:[%s254 + $0x17] sm:$0x1] %vm541, %v1210
        %1219 = vst.msk [vmem:[%s254 + $0x27] sm:$0x1] %vm541, %v1211
        %1220 = vst.msk [vmem:[%s254 + $0x37] sm:$0x1] %vm541, %v1212
        %1221 = vrot.lane.b32.xlu0 %v358, 64
        %v1222 = vpop.permute.xlu0 %1221
        %v1223 = vsel %vm365, %v1222, 0
        %1225 = vmatprep.subr.mxu0 0.0
        %1226 = vmatpush1.msra.mxu0 0.0
        %1227 = vmatprep.subr.mxu0 0.0
        %1228 = vmatpush1.msra.mxu0 0.0
        %1229 = vmatprep.subr.mxu0 0.0
        %1230 = vmatpush1.msra.mxu0 0.0
        %1231 = vmatprep.subr.mxu0 0.0
        %1232 = vmatpush1.msra.mxu0 0.0
        %1233 = vmatprep.subr.mxu0 0.0
        %1234 = vmatpush1.msra.mxu0 0.0
        %1235 = vmatprep.subr.mxu0 0.0
        %1236 = vmatpush1.msra.mxu0 0.0
        %1237 = vmatprep.subr.mxu0 0.0
        %1238 = vmatpush1.msra.mxu0 0.0
        %1239 = vmatprep.subr.mxu0 0.0
        %1240 = vmatpush1.msra.mxu0 0.0
        %1241 = vmatprep.subr.mxu0 0.0
        %1242 = vmatpush1.msra.mxu0 0.0
        %1243 = vmatprep.subr.mxu0 0.0
        %1244 = vmatpush1.msra.mxu0 0.0
        %1245 = vmatprep.subr.mxu0 0.0
        %1246 = vmatpush1.msra.mxu0 0.0
        %1247 = vmatprep.subr.mxu0 0.0
        %1248 = vmatpush1.msra.mxu0 0.0
        %1249 = vmatprep.subr.mxu0 0.0
        %1250 = vmatpush1.msra.mxu0 0.0
        %1251 = vmatprep.subr.mxu0 0.0
        %1252 = vmatpush1.msra.mxu0 0.0
        %1253 = vmatprep.subr.mxu0 0.0
        %1254 = vmatpush1.msra.mxu0 %v364
        %1255 = vmatprep.subr.mxu0 0.0
        %1256 = vmatpush1.msra.mxu0 %v363
        %1257 = vmatprep.subr.mxu0 0.0
        %1258 = vmatpush2.msra.mxu0 0.0
        %1259 = vmatprep.subr.mxu0 0.0
        %1260 = vmatpush2.msra.mxu0 0.0
        %1261 = vmatprep.subr.mxu0 0.0
        %1262 = vmatpush2.msra.mxu0 0.0
        %1263 = vmatprep.subr.mxu0 0.0
        %1264 = vmatpush2.msra.mxu0 0.0
        %1265 = vmatprep.subr.mxu0 0.0
        %1266 = vmatpush2.msra.mxu0 0.0
        %1267 = vmatprep.subr.mxu0 0.0
        %1268 = vmatpush2.msra.mxu0 0.0
        %1269 = vmatprep.subr.mxu0 0.0
        %1270 = vmatpush2.msra.mxu0 0.0
        %1271 = vmatprep.subr.mxu0 0.0
        %1272 = vmatpush2.msra.mxu0 0.0
        %1273 = vmatprep.subr.mxu0 0.0
        %1274 = vmatpush2.msra.mxu0 0.0
        %1275 = vmatprep.subr.mxu0 0.0
        %1276 = vmatpush2.msra.mxu0 0.0
        %1277 = vmatprep.subr.mxu0 0.0
        %1278 = vmatpush2.msra.mxu0 0.0
        %1279 = vmatprep.subr.mxu0 0.0
        %1280 = vmatpush2.msra.mxu0 0.0
        %1281 = vmatprep.subr.mxu0 0.0
        %1282 = vmatpush2.msra.mxu0 0.0
        %1283 = vmatprep.subr.mxu0 0.0
        %1284 = vmatpush2.msra.mxu0 0.0
        %1285 = vmatprep.subr.mxu0 0.0
        %1286 = vmatpush2.msra.mxu0 0.0
        %1287 = vmatprep.subr.mxu0 0.0
        %1288 = vmatpush2.msra.mxu0 0.0
        %1289 = vmatprep.mubr.f32.mxu0 0.0
        %1290 = vmatmul.mubr.f32.gmra.mxu0 %v1223
        %v1291 = vpop.f32.mrf.mxu0
        %v1292 = vadd.f32 0.0, %v1291
        %v1293 = vpop.f32.mrf.mxu0
        %1294 = vdwg.mxu0
        %1295 = vrot.lane.b32.xlu0 %v353, 64
        %v1296 = vpop.permute.xlu0 %1295
        %v1297 = vsel %vm365, %v1296, 0
        %1299 = vmatprep.subr.mxu0 0.0
        %1300 = vmatpush1.msra.mxu0 0.0
        %1301 = vmatprep.subr.mxu0 0.0
        %1302 = vmatpush1.msra.mxu0 0.0
        %1303 = vmatprep.subr.mxu0 0.0
        %1304 = vmatpush1.msra.mxu0 0.0
        %1305 = vmatprep.subr.mxu0 0.0
        %1306 = vmatpush1.msra.mxu0 0.0
        %1307 = vmatprep.subr.mxu0 0.0
        %1308 = vmatpush1.msra.mxu0 0.0
        %1309 = vmatprep.subr.mxu0 0.0
        %1310 = vmatpush1.msra.mxu0 0.0
        %1311 = vmatprep.subr.mxu0 0.0
        %1312 = vmatpush1.msra.mxu0 0.0
        %1313 = vmatprep.subr.mxu0 0.0
        %1314 = vmatpush1.msra.mxu0 0.0
        %1315 = vmatprep.subr.mxu0 0.0
        %1316 = vmatpush1.msra.mxu0 0.0
        %1317 = vmatprep.subr.mxu0 0.0
        %1318 = vmatpush1.msra.mxu0 0.0
        %1319 = vmatprep.subr.mxu0 0.0
        %1320 = vmatpush1.msra.mxu0 0.0
        %1321 = vmatprep.subr.mxu0 0.0
        %1322 = vmatpush1.msra.mxu0 0.0
        %1323 = vmatprep.subr.mxu0 0.0
        %1324 = vmatpush1.msra.mxu0 0.0
        %1325 = vmatprep.subr.mxu0 0.0
        %1326 = vmatpush1.msra.mxu0 0.0
        %1327 = vmatprep.subr.mxu0 0.0
        %1328 = vmatpush1.msra.mxu0 %v362
        %1329 = vmatprep.subr.mxu0 0.0
        %1330 = vmatpush1.msra.mxu0 %v361
        %1331 = vmatprep.subr.mxu0 0.0
        %1332 = vmatpush2.msra.mxu0 0.0
        %1333 = vmatprep.subr.mxu0 0.0
        %1334 = vmatpush2.msra.mxu0 0.0
        %1335 = vmatprep.subr.mxu0 0.0
        %1336 = vmatpush2.msra.mxu0 0.0
        %1337 = vmatprep.subr.mxu0 0.0
        %1338 = vmatpush2.msra.mxu0 0.0
        %1339 = vmatprep.subr.mxu0 0.0
        %1340 = vmatpush2.msra.mxu0 0.0
        %1341 = vmatprep.subr.mxu0 0.0
        %1342 = vmatpush2.msra.mxu0 0.0
        %1343 = vmatprep.subr.mxu0 0.0
        %1344 = vmatpush2.msra.mxu0 0.0
        %1345 = vmatprep.subr.mxu0 0.0
        %1346 = vmatpush2.msra.mxu0 0.0
        %1347 = vmatprep.subr.mxu0 0.0
        %1348 = vmatpush2.msra.mxu0 0.0
        %1349 = vmatprep.subr.mxu0 0.0
        %1350 = vmatpush2.msra.mxu0 0.0
        %1351 = vmatprep.subr.mxu0 0.0
        %1352 = vmatpush2.msra.mxu0 0.0
        %1353 = vmatprep.subr.mxu0 0.0
        %1354 = vmatpush2.msra.mxu0 0.0
        %1355 = vmatprep.subr.mxu0 0.0
        %1356 = vmatpush2.msra.mxu0 0.0
        %1357 = vmatprep.subr.mxu0 0.0
        %1358 = vmatpush2.msra.mxu0 0.0
        %1359 = vmatprep.subr.mxu0 0.0
        %1360 = vmatpush2.msra.mxu0 0.0
        %1361 = vmatprep.subr.mxu0 0.0
        %1362 = vmatpush2.msra.mxu0 0.0
        %1363 = vmatprep.mubr.f32.mxu0 0.0
        %1364 = vmatmul.mubr.f32.gmra.mxu0 %v1297
        %v1365 = vpop.f32.mrf.mxu0
        %v1366 = vadd.f32 %v1292, %v1365
        %v1367 = vpop.f32.mrf.mxu0
        %1368 = vdwg.mxu0
        %v1371 = vunpack.c.l.s4 1966171168
        %v1372 = vunpack.c.0.s8 %v1371
        %v1373 = vlaneseq
        %v1374 = vshrl.u32 %v1373, 7
        %v1375 = vsub.s32 %v1372, %v1374
        %v1376 = vrot.slane %v1366, %v1375
        %v1377 = vcombine.high %v1376, %v1376
        %v1379 = vunpack.c.l.s4 1966171168
        %v1380 = vunpack.c.0.s8 %v1379
        %v1381 = vlaneseq
        %v1382 = vshrl.u32 %v1381, 7
        %v1383 = vsub.s32 %v1380, %v1382
        %v1384 = vrot.slane %v1376, %v1383
        %v1386 = vunpack.c.l.s4 1966171168
        %v1387 = vunpack.c.0.s8 %v1386
        %v1388 = vlaneseq
        %v1389 = vshrl.u32 %v1388, 7
        %v1390 = vsub.s32 %v1387, %v1389
        %v1391 = vrot.slane %v1377, %v1390
        %v1392 = vcombine.high %v1384, %v1384
        %v1393 = vcombine.high %v1391, %v1391
        %1398 = vst.msk [vmem:[%s254 + $0x8] sm:$0x1] %vm541, %v1384
        %1399 = vst.msk [vmem:[%s254 + $0x18] sm:$0x1] %vm541, %v1391
        %1400 = vst.msk [vmem:[%s254 + $0x28] sm:$0x1] %vm541, %v1392
        %1401 = vst.msk [vmem:[%s254 + $0x38] sm:$0x1] %vm541, %v1393
        %v1402 = vcombine.high %v1366, %v1366
        %v1404 = vunpack.c.l.s4 1966171168
        %v1405 = vunpack.c.0.s8 %v1404
        %v1406 = vlaneseq
        %v1407 = vshrl.u32 %v1406, 7
        %v1408 = vsub.s32 %v1405, %v1407
        %v1409 = vrot.slane %v1402, %v1408
        %v1410 = vcombine.high %v1409, %v1409
        %v1412 = vunpack.c.l.s4 1966171168
        %v1413 = vunpack.c.0.s8 %v1412
        %v1414 = vlaneseq
        %v1415 = vshrl.u32 %v1414, 7
        %v1416 = vsub.s32 %v1413, %v1415
        %v1417 = vrot.slane %v1409, %v1416
        %v1419 = vunpack.c.l.s4 1966171168
        %v1420 = vunpack.c.0.s8 %v1419
        %v1421 = vlaneseq
        %v1422 = vshrl.u32 %v1421, 7
        %v1423 = vsub.s32 %v1420, %v1422
        %v1424 = vrot.slane %v1410, %v1423
        %v1425 = vcombine.high %v1417, %v1417
        %v1426 = vcombine.high %v1424, %v1424
        %1431 = vst.msk [vmem:[%s254 + $0x9] sm:$0x1] %vm541, %v1417
        %1432 = vst.msk [vmem:[%s254 + $0x19] sm:$0x1] %vm541, %v1424
        %1433 = vst.msk [vmem:[%s254 + $0x29] sm:$0x1] %vm541, %v1425
        %1434 = vst.msk [vmem:[%s254 + $0x39] sm:$0x1] %vm541, %v1426
        %1435 = vrot.lane.b32.xlu0 %v358, 48
        %v1436 = vpop.permute.xlu0 %1435
        %v1437 = vsel %vm365, %v1436, 0
        %1439 = vmatprep.subr.mxu0 0.0
        %1440 = vmatpush1.msra.mxu0 0.0
        %1441 = vmatprep.subr.mxu0 0.0
        %1442 = vmatpush1.msra.mxu0 0.0
        %1443 = vmatprep.subr.mxu0 0.0
        %1444 = vmatpush1.msra.mxu0 0.0
        %1445 = vmatprep.subr.mxu0 0.0
        %1446 = vmatpush1.msra.mxu0 0.0
        %1447 = vmatprep.subr.mxu0 0.0
        %1448 = vmatpush1.msra.mxu0 0.0
        %1449 = vmatprep.subr.mxu0 0.0
        %1450 = vmatpush1.msra.mxu0 0.0
        %1451 = vmatprep.subr.mxu0 0.0
        %1452 = vmatpush1.msra.mxu0 0.0
        %1453 = vmatprep.subr.mxu0 0.0
        %1454 = vmatpush1.msra.mxu0 0.0
        %1455 = vmatprep.subr.mxu0 0.0
        %1456 = vmatpush1.msra.mxu0 0.0
        %1457 = vmatprep.subr.mxu0 0.0
        %1458 = vmatpush1.msra.mxu0 0.0
        %1459 = vmatprep.subr.mxu0 0.0
        %1460 = vmatpush1.msra.mxu0 0.0
        %1461 = vmatprep.subr.mxu0 0.0
        %1462 = vmatpush1.msra.mxu0 0.0
        %1463 = vmatprep.subr.mxu0 0.0
        %1464 = vmatpush1.msra.mxu0 0.0
        %1465 = vmatprep.subr.mxu0 0.0
        %1466 = vmatpush1.msra.mxu0 0.0
        %1467 = vmatprep.subr.mxu0 0.0
        %1468 = vmatpush1.msra.mxu0 %v364
        %1469 = vmatprep.subr.mxu0 0.0
        %1470 = vmatpush1.msra.mxu0 %v363
        %1471 = vmatprep.subr.mxu0 0.0
        %1472 = vmatpush2.msra.mxu0 0.0
        %1473 = vmatprep.subr.mxu0 0.0
        %1474 = vmatpush2.msra.mxu0 0.0
        %1475 = vmatprep.subr.mxu0 0.0
        %1476 = vmatpush2.msra.mxu0 0.0
        %1477 = vmatprep.subr.mxu0 0.0
        %1478 = vmatpush2.msra.mxu0 0.0
        %1479 = vmatprep.subr.mxu0 0.0
        %1480 = vmatpush2.msra.mxu0 0.0
        %1481 = vmatprep.subr.mxu0 0.0
        %1482 = vmatpush2.msra.mxu0 0.0
        %1483 = vmatprep.subr.mxu0 0.0
        %1484 = vmatpush2.msra.mxu0 0.0
        %1485 = vmatprep.subr.mxu0 0.0
        %1486 = vmatpush2.msra.mxu0 0.0
        %1487 = vmatprep.subr.mxu0 0.0
        %1488 = vmatpush2.msra.mxu0 0.0
        %1489 = vmatprep.subr.mxu0 0.0
        %1490 = vmatpush2.msra.mxu0 0.0
        %1491 = vmatprep.subr.mxu0 0.0
        %1492 = vmatpush2.msra.mxu0 0.0
        %1493 = vmatprep.subr.mxu0 0.0
        %1494 = vmatpush2.msra.mxu0 0.0
        %1495 = vmatprep.subr.mxu0 0.0
        %1496 = vmatpush2.msra.mxu0 0.0
        %1497 = vmatprep.subr.mxu0 0.0
        %1498 = vmatpush2.msra.mxu0 0.0
        %1499 = vmatprep.subr.mxu0 0.0
        %1500 = vmatpush2.msra.mxu0 0.0
        %1501 = vmatprep.subr.mxu0 0.0
        %1502 = vmatpush2.msra.mxu0 0.0
        %1503 = vmatprep.mubr.f32.mxu0 0.0
        %1504 = vmatmul.mubr.f32.gmra.mxu0 %v1437
        %v1505 = vpop.f32.mrf.mxu0
        %v1506 = vadd.f32 0.0, %v1505
        %v1507 = vpop.f32.mrf.mxu0
        %1508 = vdwg.mxu0
        %1509 = vrot.lane.b32.xlu0 %v353, 48
        %v1510 = vpop.permute.xlu0 %1509
        %v1511 = vsel %vm365, %v1510, 0
        %1513 = vmatprep.subr.mxu0 0.0
        %1514 = vmatpush1.msra.mxu0 0.0
        %1515 = vmatprep.subr.mxu0 0.0
        %1516 = vmatpush1.msra.mxu0 0.0
        %1517 = vmatprep.subr.mxu0 0.0
        %1518 = vmatpush1.msra.mxu0 0.0
        %1519 = vmatprep.subr.mxu0 0.0
        %1520 = vmatpush1.msra.mxu0 0.0
        %1521 = vmatprep.subr.mxu0 0.0
        %1522 = vmatpush1.msra.mxu0 0.0
        %1523 = vmatprep.subr.mxu0 0.0
        %1524 = vmatpush1.msra.mxu0 0.0
        %1525 = vmatprep.subr.mxu0 0.0
        %1526 = vmatpush1.msra.mxu0 0.0
        %1527 = vmatprep.subr.mxu0 0.0
        %1528 = vmatpush1.msra.mxu0 0.0
        %1529 = vmatprep.subr.mxu0 0.0
        %1530 = vmatpush1.msra.mxu0 0.0
        %1531 = vmatprep.subr.mxu0 0.0
        %1532 = vmatpush1.msra.mxu0 0.0
        %1533 = vmatprep.subr.mxu0 0.0
        %1534 = vmatpush1.msra.mxu0 0.0
        %1535 = vmatprep.subr.mxu0 0.0
        %1536 = vmatpush1.msra.mxu0 0.0
        %1537 = vmatprep.subr.mxu0 0.0
        %1538 = vmatpush1.msra.mxu0 0.0
        %1539 = vmatprep.subr.mxu0 0.0
        %1540 = vmatpush1.msra.mxu0 0.0
        %1541 = vmatprep.subr.mxu0 0.0
        %1542 = vmatpush1.msra.mxu0 %v362
        %1543 = vmatprep.subr.mxu0 0.0
        %1544 = vmatpush1.msra.mxu0 %v361
        %1545 = vmatprep.subr.mxu0 0.0
        %1546 = vmatpush2.msra.mxu0 0.0
        %1547 = vmatprep.subr.mxu0 0.0
        %1548 = vmatpush2.msra.mxu0 0.0
        %1549 = vmatprep.subr.mxu0 0.0
        %1550 = vmatpush2.msra.mxu0 0.0
        %1551 = vmatprep.subr.mxu0 0.0
        %1552 = vmatpush2.msra.mxu0 0.0
        %1553 = vmatprep.subr.mxu0 0.0
        %1554 = vmatpush2.msra.mxu0 0.0
        %1555 = vmatprep.subr.mxu0 0.0
        %1556 = vmatpush2.msra.mxu0 0.0
        %1557 = vmatprep.subr.mxu0 0.0
        %1558 = vmatpush2.msra.mxu0 0.0
        %1559 = vmatprep.subr.mxu0 0.0
        %1560 = vmatpush2.msra.mxu0 0.0
        %1561 = vmatprep.subr.mxu0 0.0
        %1562 = vmatpush2.msra.mxu0 0.0
        %1563 = vmatprep.subr.mxu0 0.0
        %1564 = vmatpush2.msra.mxu0 0.0
        %1565 = vmatprep.subr.mxu0 0.0
        %1566 = vmatpush2.msra.mxu0 0.0
        %1567 = vmatprep.subr.mxu0 0.0
        %1568 = vmatpush2.msra.mxu0 0.0
        %1569 = vmatprep.subr.mxu0 0.0
        %1570 = vmatpush2.msra.mxu0 0.0
        %1571 = vmatprep.subr.mxu0 0.0
        %1572 = vmatpush2.msra.mxu0 0.0
        %1573 = vmatprep.subr.mxu0 0.0
        %1574 = vmatpush2.msra.mxu0 0.0
        %1575 = vmatprep.subr.mxu0 0.0
        %1576 = vmatpush2.msra.mxu0 0.0
        %1577 = vmatprep.mubr.f32.mxu0 0.0
        %1578 = vmatmul.mubr.f32.gmra.mxu0 %v1511
        %v1579 = vpop.f32.mrf.mxu0
        %v1580 = vadd.f32 %v1506, %v1579
        %v1581 = vpop.f32.mrf.mxu0
        %1582 = vdwg.mxu0
        %v1585 = vunpack.c.l.s4 1966171168
        %v1586 = vunpack.c.0.s8 %v1585
        %v1587 = vlaneseq
        %v1588 = vshrl.u32 %v1587, 7
        %v1589 = vsub.s32 %v1586, %v1588
        %v1590 = vrot.slane %v1580, %v1589
        %v1591 = vcombine.high %v1590, %v1590
        %v1593 = vunpack.c.l.s4 1966171168
        %v1594 = vunpack.c.0.s8 %v1593
        %v1595 = vlaneseq
        %v1596 = vshrl.u32 %v1595, 7
        %v1597 = vsub.s32 %v1594, %v1596
        %v1598 = vrot.slane %v1590, %v1597
        %v1600 = vunpack.c.l.s4 1966171168
        %v1601 = vunpack.c.0.s8 %v1600
        %v1602 = vlaneseq
        %v1603 = vshrl.u32 %v1602, 7
        %v1604 = vsub.s32 %v1601, %v1603
        %v1605 = vrot.slane %v1591, %v1604
        %v1606 = vcombine.high %v1598, %v1598
        %v1607 = vcombine.high %v1605, %v1605
        %1612 = vst.msk [vmem:[%s254 + $0xa] sm:$0x1] %vm541, %v1598
        %1613 = vst.msk [vmem:[%s254 + $0x1a] sm:$0x1] %vm541, %v1605
        %1614 = vst.msk [vmem:[%s254 + $0x2a] sm:$0x1] %vm541, %v1606
        %1615 = vst.msk [vmem:[%s254 + $0x3a] sm:$0x1] %vm541, %v1607
        %v1616 = vcombine.high %v1580, %v1580
        %v1618 = vunpack.c.l.s4 1966171168
        %v1619 = vunpack.c.0.s8 %v1618
        %v1620 = vlaneseq
        %v1621 = vshrl.u32 %v1620, 7
        %v1622 = vsub.s32 %v1619, %v1621
        %v1623 = vrot.slane %v1616, %v1622
        %v1624 = vcombine.high %v1623, %v1623
        %v1626 = vunpack.c.l.s4 1966171168
        %v1627 = vunpack.c.0.s8 %v1626
        %v1628 = vlaneseq
        %v1629 = vshrl.u32 %v1628, 7
        %v1630 = vsub.s32 %v1627, %v1629
        %v1631 = vrot.slane %v1623, %v1630
        %v1633 = vunpack.c.l.s4 1966171168
        %v1634 = vunpack.c.0.s8 %v1633
        %v1635 = vlaneseq
        %v1636 = vshrl.u32 %v1635, 7
        %v1637 = vsub.s32 %v1634, %v1636
        %v1638 = vrot.slane %v1624, %v1637
        %v1639 = vcombine.high %v1631, %v1631
        %v1640 = vcombine.high %v1638, %v1638
        %1645 = vst.msk [vmem:[%s254 + $0xb] sm:$0x1] %vm541, %v1631
        %1646 = vst.msk [vmem:[%s254 + $0x1b] sm:$0x1] %vm541, %v1638
        %1647 = vst.msk [vmem:[%s254 + $0x2b] sm:$0x1] %vm541, %v1639
        %1648 = vst.msk [vmem:[%s254 + $0x3b] sm:$0x1] %vm541, %v1640
        %1649 = vrot.lane.b32.xlu0 %v358, 32
        %v1650 = vpop.permute.xlu0 %1649
        %v1651 = vsel %vm365, %v1650, 0
        %1653 = vmatprep.subr.mxu0 0.0
        %1654 = vmatpush1.msra.mxu0 0.0
        %1655 = vmatprep.subr.mxu0 0.0
        %1656 = vmatpush1.msra.mxu0 0.0
        %1657 = vmatprep.subr.mxu0 0.0
        %1658 = vmatpush1.msra.mxu0 0.0
        %1659 = vmatprep.subr.mxu0 0.0
        %1660 = vmatpush1.msra.mxu0 0.0
        %1661 = vmatprep.subr.mxu0 0.0
        %1662 = vmatpush1.msra.mxu0 0.0
        %1663 = vmatprep.subr.mxu0 0.0
        %1664 = vmatpush1.msra.mxu0 0.0
        %1665 = vmatprep.subr.mxu0 0.0
        %1666 = vmatpush1.msra.mxu0 0.0
        %1667 = vmatprep.subr.mxu0 0.0
        %1668 = vmatpush1.msra.mxu0 0.0
        %1669 = vmatprep.subr.mxu0 0.0
        %1670 = vmatpush1.msra.mxu0 0.0
        %1671 = vmatprep.subr.mxu0 0.0
        %1672 = vmatpush1.msra.mxu0 0.0
        %1673 = vmatprep.subr.mxu0 0.0
        %1674 = vmatpush1.msra.mxu0 0.0
        %1675 = vmatprep.subr.mxu0 0.0
        %1676 = vmatpush1.msra.mxu0 0.0
        %1677 = vmatprep.subr.mxu0 0.0
        %1678 = vmatpush1.msra.mxu0 0.0
        %1679 = vmatprep.subr.mxu0 0.0
        %1680 = vmatpush1.msra.mxu0 0.0
        %1681 = vmatprep.subr.mxu0 0.0
        %1682 = vmatpush1.msra.mxu0 %v364
        %1683 = vmatprep.subr.mxu0 0.0
        %1684 = vmatpush1.msra.mxu0 %v363
        %1685 = vmatprep.subr.mxu0 0.0
        %1686 = vmatpush2.msra.mxu0 0.0
        %1687 = vmatprep.subr.mxu0 0.0
        %1688 = vmatpush2.msra.mxu0 0.0
        %1689 = vmatprep.subr.mxu0 0.0
        %1690 = vmatpush2.msra.mxu0 0.0
        %1691 = vmatprep.subr.mxu0 0.0
        %1692 = vmatpush2.msra.mxu0 0.0
        %1693 = vmatprep.subr.mxu0 0.0
        %1694 = vmatpush2.msra.mxu0 0.0
        %1695 = vmatprep.subr.mxu0 0.0
        %1696 = vmatpush2.msra.mxu0 0.0
        %1697 = vmatprep.subr.mxu0 0.0
        %1698 = vmatpush2.msra.mxu0 0.0
        %1699 = vmatprep.subr.mxu0 0.0
        %1700 = vmatpush2.msra.mxu0 0.0
        %1701 = vmatprep.subr.mxu0 0.0
        %1702 = vmatpush2.msra.mxu0 0.0
        %1703 = vmatprep.subr.mxu0 0.0
        %1704 = vmatpush2.msra.mxu0 0.0
        %1705 = vmatprep.subr.mxu0 0.0
        %1706 = vmatpush2.msra.mxu0 0.0
        %1707 = vmatprep.subr.mxu0 0.0
        %1708 = vmatpush2.msra.mxu0 0.0
        %1709 = vmatprep.subr.mxu0 0.0
        %1710 = vmatpush2.msra.mxu0 0.0
        %1711 = vmatprep.subr.mxu0 0.0
        %1712 = vmatpush2.msra.mxu0 0.0
        %1713 = vmatprep.subr.mxu0 0.0
        %1714 = vmatpush2.msra.mxu0 0.0
        %1715 = vmatprep.subr.mxu0 0.0
        %1716 = vmatpush2.msra.mxu0 0.0
        %1717 = vmatprep.mubr.f32.mxu0 0.0
        %1718 = vmatmul.mubr.f32.gmra.mxu0 %v1651
        %v1719 = vpop.f32.mrf.mxu0
        %v1720 = vadd.f32 0.0, %v1719
        %v1721 = vpop.f32.mrf.mxu0
        %1722 = vdwg.mxu0
        %1723 = vrot.lane.b32.xlu0 %v353, 32
        %v1724 = vpop.permute.xlu0 %1723
        %v1725 = vsel %vm365, %v1724, 0
        %1727 = vmatprep.subr.mxu0 0.0
        %1728 = vmatpush1.msra.mxu0 0.0
        %1729 = vmatprep.subr.mxu0 0.0
        %1730 = vmatpush1.msra.mxu0 0.0
        %1731 = vmatprep.subr.mxu0 0.0
        %1732 = vmatpush1.msra.mxu0 0.0
        %1733 = vmatprep.subr.mxu0 0.0
        %1734 = vmatpush1.msra.mxu0 0.0
        %1735 = vmatprep.subr.mxu0 0.0
        %1736 = vmatpush1.msra.mxu0 0.0
        %1737 = vmatprep.subr.mxu0 0.0
        %1738 = vmatpush1.msra.mxu0 0.0
        %1739 = vmatprep.subr.mxu0 0.0
        %1740 = vmatpush1.msra.mxu0 0.0
        %1741 = vmatprep.subr.mxu0 0.0
        %1742 = vmatpush1.msra.mxu0 0.0
        %1743 = vmatprep.subr.mxu0 0.0
        %1744 = vmatpush1.msra.mxu0 0.0
        %1745 = vmatprep.subr.mxu0 0.0
        %1746 = vmatpush1.msra.mxu0 0.0
        %1747 = vmatprep.subr.mxu0 0.0
        %1748 = vmatpush1.msra.mxu0 0.0
        %1749 = vmatprep.subr.mxu0 0.0
        %1750 = vmatpush1.msra.mxu0 0.0
        %1751 = vmatprep.subr.mxu0 0.0
        %1752 = vmatpush1.msra.mxu0 0.0
        %1753 = vmatprep.subr.mxu0 0.0
        %1754 = vmatpush1.msra.mxu0 0.0
        %1755 = vmatprep.subr.mxu0 0.0
        %1756 = vmatpush1.msra.mxu0 %v362
        %1757 = vmatprep.subr.mxu0 0.0
        %1758 = vmatpush1.msra.mxu0 %v361
        %1759 = vmatprep.subr.mxu0 0.0
        %1760 = vmatpush2.msra.mxu0 0.0
        %1761 = vmatprep.subr.mxu0 0.0
        %1762 = vmatpush2.msra.mxu0 0.0
        %1763 = vmatprep.subr.mxu0 0.0
        %1764 = vmatpush2.msra.mxu0 0.0
        %1765 = vmatprep.subr.mxu0 0.0
        %1766 = vmatpush2.msra.mxu0 0.0
        %1767 = vmatprep.subr.mxu0 0.0
        %1768 = vmatpush2.msra.mxu0 0.0
        %1769 = vmatprep.subr.mxu0 0.0
        %1770 = vmatpush2.msra.mxu0 0.0
        %1771 = vmatprep.subr.mxu0 0.0
        %1772 = vmatpush2.msra.mxu0 0.0
        %1773 = vmatprep.subr.mxu0 0.0
        %1774 = vmatpush2.msra.mxu0 0.0
        %1775 = vmatprep.subr.mxu0 0.0
        %1776 = vmatpush2.msra.mxu0 0.0
        %1777 = vmatprep.subr.mxu0 0.0
        %1778 = vmatpush2.msra.mxu0 0.0
        %1779 = vmatprep.subr.mxu0 0.0
        %1780 = vmatpush2.msra.mxu0 0.0
        %1781 = vmatprep.subr.mxu0 0.0
        %1782 = vmatpush2.msra.mxu0 0.0
        %1783 = vmatprep.subr.mxu0 0.0
        %1784 = vmatpush2.msra.mxu0 0.0
        %1785 = vmatprep.subr.mxu0 0.0
        %1786 = vmatpush2.msra.mxu0 0.0
        %1787 = vmatprep.subr.mxu0 0.0
        %1788 = vmatpush2.msra.mxu0 0.0
        %1789 = vmatprep.subr.mxu0 0.0
        %1790 = vmatpush2.msra.mxu0 0.0
        %1791 = vmatprep.mubr.f32.mxu0 0.0
        %1792 = vmatmul.mubr.f32.gmra.mxu0 %v1725
        %v1793 = vpop.f32.mrf.mxu0
        %v1794 = vadd.f32 %v1720, %v1793
        %v1795 = vpop.f32.mrf.mxu0
        %1796 = vdwg.mxu0
        %v1799 = vunpack.c.l.s4 1966171168
        %v1800 = vunpack.c.0.s8 %v1799
        %v1801 = vlaneseq
        %v1802 = vshrl.u32 %v1801, 7
        %v1803 = vsub.s32 %v1800, %v1802
        %v1804 = vrot.slane %v1794, %v1803
        %v1805 = vcombine.high %v1804, %v1804
        %v1807 = vunpack.c.l.s4 1966171168
        %v1808 = vunpack.c.0.s8 %v1807
        %v1809 = vlaneseq
        %v1810 = vshrl.u32 %v1809, 7
        %v1811 = vsub.s32 %v1808, %v1810
        %v1812 = vrot.slane %v1804, %v1811
        %v1814 = vunpack.c.l.s4 1966171168
        %v1815 = vunpack.c.0.s8 %v1814
        %v1816 = vlaneseq
        %v1817 = vshrl.u32 %v1816, 7
        %v1818 = vsub.s32 %v1815, %v1817
        %v1819 = vrot.slane %v1805, %v1818
        %v1820 = vcombine.high %v1812, %v1812
        %v1821 = vcombine.high %v1819, %v1819
        %1826 = vst.msk [vmem:[%s254 + $0xc] sm:$0x1] %vm541, %v1812
        %1827 = vst.msk [vmem:[%s254 + $0x1c] sm:$0x1] %vm541, %v1819
        %1828 = vst.msk [vmem:[%s254 + $0x2c] sm:$0x1] %vm541, %v1820
        %1829 = vst.msk [vmem:[%s254 + $0x3c] sm:$0x1] %vm541, %v1821
        %v1830 = vcombine.high %v1794, %v1794
        %v1832 = vunpack.c.l.s4 1966171168
        %v1833 = vunpack.c.0.s8 %v1832
        %v1834 = vlaneseq
        %v1835 = vshrl.u32 %v1834, 7
        %v1836 = vsub.s32 %v1833, %v1835
        %v1837 = vrot.slane %v1830, %v1836
        %v1838 = vcombine.high %v1837, %v1837
        %v1840 = vunpack.c.l.s4 1966171168
        %v1841 = vunpack.c.0.s8 %v1840
        %v1842 = vlaneseq
        %v1843 = vshrl.u32 %v1842, 7
        %v1844 = vsub.s32 %v1841, %v1843
        %v1845 = vrot.slane %v1837, %v1844
        %v1847 = vunpack.c.l.s4 1966171168
        %v1848 = vunpack.c.0.s8 %v1847
        %v1849 = vlaneseq
        %v1850 = vshrl.u32 %v1849, 7
        %v1851 = vsub.s32 %v1848, %v1850
        %v1852 = vrot.slane %v1838, %v1851
        %v1853 = vcombine.high %v1845, %v1845
        %v1854 = vcombine.high %v1852, %v1852
        %1859 = vst.msk [vmem:[%s254 + $0xd] sm:$0x1] %vm541, %v1845
        %1860 = vst.msk [vmem:[%s254 + $0x1d] sm:$0x1] %vm541, %v1852
        %1861 = vst.msk [vmem:[%s254 + $0x2d] sm:$0x1] %vm541, %v1853
        %1862 = vst.msk [vmem:[%s254 + $0x3d] sm:$0x1] %vm541, %v1854
        %1863 = vrot.lane.b32.xlu0 %v358, 16
        %v1864 = vpop.permute.xlu0 %1863
        %v1865 = vsel %vm365, %v1864, 0
        %1867 = vmatprep.subr.mxu0 0.0
        %1868 = vmatpush1.msra.mxu0 0.0
        %1869 = vmatprep.subr.mxu0 0.0
        %1870 = vmatpush1.msra.mxu0 0.0
        %1871 = vmatprep.subr.mxu0 0.0
        %1872 = vmatpush1.msra.mxu0 0.0
        %1873 = vmatprep.subr.mxu0 0.0
        %1874 = vmatpush1.msra.mxu0 0.0
        %1875 = vmatprep.subr.mxu0 0.0
        %1876 = vmatpush1.msra.mxu0 0.0
        %1877 = vmatprep.subr.mxu0 0.0
        %1878 = vmatpush1.msra.mxu0 0.0
        %1879 = vmatprep.subr.mxu0 0.0
        %1880 = vmatpush1.msra.mxu0 0.0
        %1881 = vmatprep.subr.mxu0 0.0
        %1882 = vmatpush1.msra.mxu0 0.0
        %1883 = vmatprep.subr.mxu0 0.0
        %1884 = vmatpush1.msra.mxu0 0.0
        %1885 = vmatprep.subr.mxu0 0.0
        %1886 = vmatpush1.msra.mxu0 0.0
        %1887 = vmatprep.subr.mxu0 0.0
        %1888 = vmatpush1.msra.mxu0 0.0
        %1889 = vmatprep.subr.mxu0 0.0
        %1890 = vmatpush1.msra.mxu0 0.0
        %1891 = vmatprep.subr.mxu0 0.0
        %1892 = vmatpush1.msra.mxu0 0.0
        %1893 = vmatprep.subr.mxu0 0.0
        %1894 = vmatpush1.msra.mxu0 0.0
        %1895 = vmatprep.subr.mxu0 0.0
        %1896 = vmatpush1.msra.mxu0 %v364
        %1897 = vmatprep.subr.mxu0 0.0
        %1898 = vmatpush1.msra.mxu0 %v363
        %1899 = vmatprep.subr.mxu0 0.0
        %1900 = vmatpush2.msra.mxu0 0.0
        %1901 = vmatprep.subr.mxu0 0.0
        %1902 = vmatpush2.msra.mxu0 0.0
        %1903 = vmatprep.subr.mxu0 0.0
        %1904 = vmatpush2.msra.mxu0 0.0
        %1905 = vmatprep.subr.mxu0 0.0
        %1906 = vmatpush2.msra.mxu0 0.0
        %1907 = vmatprep.subr.mxu0 0.0
        %1908 = vmatpush2.msra.mxu0 0.0
        %1909 = vmatprep.subr.mxu0 0.0
        %1910 = vmatpush2.msra.mxu0 0.0
        %1911 = vmatprep.subr.mxu0 0.0
        %1912 = vmatpush2.msra.mxu0 0.0
        %1913 = vmatprep.subr.mxu0 0.0
        %1914 = vmatpush2.msra.mxu0 0.0
        %1915 = vmatprep.subr.mxu0 0.0
        %1916 = vmatpush2.msra.mxu0 0.0
        %1917 = vmatprep.subr.mxu0 0.0
        %1918 = vmatpush2.msra.mxu0 0.0
        %1919 = vmatprep.subr.mxu0 0.0
        %1920 = vmatpush2.msra.mxu0 0.0
        %1921 = vmatprep.subr.mxu0 0.0
        %1922 = vmatpush2.msra.mxu0 0.0
        %1923 = vmatprep.subr.mxu0 0.0
        %1924 = vmatpush2.msra.mxu0 0.0
        %1925 = vmatprep.subr.mxu0 0.0
        %1926 = vmatpush2.msra.mxu0 0.0
        %1927 = vmatprep.subr.mxu0 0.0
        %1928 = vmatpush2.msra.mxu0 0.0
        %1929 = vmatprep.subr.mxu0 0.0
        %1930 = vmatpush2.msra.mxu0 0.0
        %1931 = vmatprep.mubr.f32.mxu0 0.0
        %1932 = vmatmul.mubr.f32.gmra.mxu0 %v1865
        %v1933 = vpop.f32.mrf.mxu0
        %v1934 = vadd.f32 0.0, %v1933
        %v1935 = vpop.f32.mrf.mxu0
        %1936 = vdwg.mxu0
        %1937 = vrot.lane.b32.xlu0 %v353, 16
        %v1938 = vpop.permute.xlu0 %1937
        %v1939 = vsel %vm365, %v1938, 0
        %1941 = vmatprep.subr.mxu0 0.0
        %1942 = vmatpush1.msra.mxu0 0.0
        %1943 = vmatprep.subr.mxu0 0.0
        %1944 = vmatpush1.msra.mxu0 0.0
        %1945 = vmatprep.subr.mxu0 0.0
        %1946 = vmatpush1.msra.mxu0 0.0
        %1947 = vmatprep.subr.mxu0 0.0
        %1948 = vmatpush1.msra.mxu0 0.0
        %1949 = vmatprep.subr.mxu0 0.0
        %1950 = vmatpush1.msra.mxu0 0.0
        %1951 = vmatprep.subr.mxu0 0.0
        %1952 = vmatpush1.msra.mxu0 0.0
        %1953 = vmatprep.subr.mxu0 0.0
        %1954 = vmatpush1.msra.mxu0 0.0
        %1955 = vmatprep.subr.mxu0 0.0
        %1956 = vmatpush1.msra.mxu0 0.0
        %1957 = vmatprep.subr.mxu0 0.0
        %1958 = vmatpush1.msra.mxu0 0.0
        %1959 = vmatprep.subr.mxu0 0.0
        %1960 = vmatpush1.msra.mxu0 0.0
        %1961 = vmatprep.subr.mxu0 0.0
        %1962 = vmatpush1.msra.mxu0 0.0
        %1963 = vmatprep.subr.mxu0 0.0
        %1964 = vmatpush1.msra.mxu0 0.0
        %1965 = vmatprep.subr.mxu0 0.0
        %1966 = vmatpush1.msra.mxu0 0.0
        %1967 = vmatprep.subr.mxu0 0.0
        %1968 = vmatpush1.msra.mxu0 0.0
        %1969 = vmatprep.subr.mxu0 0.0
        %1970 = vmatpush1.msra.mxu0 %v362
        %1971 = vmatprep.subr.mxu0 0.0
        %1972 = vmatpush1.msra.mxu0 %v361
        %1973 = vmatprep.subr.mxu0 0.0
        %1974 = vmatpush2.msra.mxu0 0.0
        %1975 = vmatprep.subr.mxu0 0.0
        %1976 = vmatpush2.msra.mxu0 0.0
        %1977 = vmatprep.subr.mxu0 0.0
        %1978 = vmatpush2.msra.mxu0 0.0
        %1979 = vmatprep.subr.mxu0 0.0
        %1980 = vmatpush2.msra.mxu0 0.0
        %1981 = vmatprep.subr.mxu0 0.0
        %1982 = vmatpush2.msra.mxu0 0.0
        %1983 = vmatprep.subr.mxu0 0.0
        %1984 = vmatpush2.msra.mxu0 0.0
        %1985 = vmatprep.subr.mxu0 0.0
        %1986 = vmatpush2.msra.mxu0 0.0
        %1987 = vmatprep.subr.mxu0 0.0
        %1988 = vmatpush2.msra.mxu0 0.0
        %1989 = vmatprep.subr.mxu0 0.0
        %1990 = vmatpush2.msra.mxu0 0.0
        %1991 = vmatprep.subr.mxu0 0.0
        %1992 = vmatpush2.msra.mxu0 0.0
        %1993 = vmatprep.subr.mxu0 0.0
        %1994 = vmatpush2.msra.mxu0 0.0
        %1995 = vmatprep.subr.mxu0 0.0
        %1996 = vmatpush2.msra.mxu0 0.0
        %1997 = vmatprep.subr.mxu0 0.0
        %1998 = vmatpush2.msra.mxu0 0.0
        %1999 = vmatprep.subr.mxu0 0.0
        %2000 = vmatpush2.msra.mxu0 0.0
        %2001 = vmatprep.subr.mxu0 0.0
        %2002 = vmatpush2.msra.mxu0 0.0
        %2003 = vmatprep.subr.mxu0 0.0
        %2004 = vmatpush2.msra.mxu0 0.0
        %2005 = vmatprep.mubr.f32.mxu0 0.0
        %2006 = vmatmul.mubr.f32.gmra.mxu0 %v1939
        %v2007 = vpop.f32.mrf.mxu0
        %v2008 = vadd.f32 %v1934, %v2007
        %v2009 = vpop.f32.mrf.mxu0
        %2010 = vdwg.mxu0
        %v2013 = vunpack.c.l.s4 1966171168
        %v2014 = vunpack.c.0.s8 %v2013
        %v2015 = vlaneseq
        %v2016 = vshrl.u32 %v2015, 7
        %v2017 = vsub.s32 %v2014, %v2016
        %v2018 = vrot.slane %v2008, %v2017
        %v2019 = vcombine.high %v2018, %v2018
        %v2021 = vunpack.c.l.s4 1966171168
        %v2022 = vunpack.c.0.s8 %v2021
        %v2023 = vlaneseq
        %v2024 = vshrl.u32 %v2023, 7
        %v2025 = vsub.s32 %v2022, %v2024
        %v2026 = vrot.slane %v2018, %v2025
        %v2028 = vunpack.c.l.s4 1966171168
        %v2029 = vunpack.c.0.s8 %v2028
        %v2030 = vlaneseq
        %v2031 = vshrl.u32 %v2030, 7
        %v2032 = vsub.s32 %v2029, %v2031
        %v2033 = vrot.slane %v2019, %v2032
        %v2034 = vcombine.high %v2026, %v2026
        %v2035 = vcombine.high %v2033, %v2033
        %2040 = vst.msk [vmem:[%s254 + $0xe] sm:$0x1] %vm541, %v2026
        %2041 = vst.msk [vmem:[%s254 + $0x1e] sm:$0x1] %vm541, %v2033
        %2042 = vst.msk [vmem:[%s254 + $0x2e] sm:$0x1] %vm541, %v2034
        %2043 = vst.msk [vmem:[%s254 + $0x3e] sm:$0x1] %vm541, %v2035
        %v2044 = vcombine.high %v2008, %v2008
        %v2046 = vunpack.c.l.s4 1966171168
        %v2047 = vunpack.c.0.s8 %v2046
        %v2048 = vlaneseq
        %v2049 = vshrl.u32 %v2048, 7
        %v2050 = vsub.s32 %v2047, %v2049
        %v2051 = vrot.slane %v2044, %v2050
        %v2052 = vcombine.high %v2051, %v2051
        %v2054 = vunpack.c.l.s4 1966171168
        %v2055 = vunpack.c.0.s8 %v2054
        %v2056 = vlaneseq
        %v2057 = vshrl.u32 %v2056, 7
        %v2058 = vsub.s32 %v2055, %v2057
        %v2059 = vrot.slane %v2051, %v2058
        %v2061 = vunpack.c.l.s4 1966171168
        %v2062 = vunpack.c.0.s8 %v2061
        %v2063 = vlaneseq
        %v2064 = vshrl.u32 %v2063, 7
        %v2065 = vsub.s32 %v2062, %v2064
        %v2066 = vrot.slane %v2052, %v2065
        %v2067 = vcombine.high %v2059, %v2059
        %v2068 = vcombine.high %v2066, %v2066
        %2073 = vst.msk [vmem:[%s254 + $0xf] sm:$0x1] %vm541, %v2059
        %2074 = vst.msk [vmem:[%s254 + $0x1f] sm:$0x1] %vm541, %v2066
        %2075 = vst.msk [vmem:[%s254 + $0x2f] sm:$0x1] %vm541, %v2067
        %2076 = vst.msk [vmem:[%s254 + $0x3f] sm:$0x1] %vm541, %v2068
        %s2077 = sand.u32 %s154, 1
        %s2078 = scalar_lea.sflag [#allocation4], %s2077
        %s2079 = sand.u32 %s154, 1
        %s2080 = smul.addr %s2079, 64
        %s2081 = scalar_lea.vmem [#allocation5], %s2080
        // Predicated region
        $region45: #{tpu_custom_call.1} parent=39 // pred_check
          %p2082 = pneg %p164
        $region46: #{tpu_custom_call.1} parent=39 // pred_check_branch
          %2084 = sbr.rel (%p2082) target = $region48
        $region47: #{tpu_custom_call.1} parent=39 // pred_region
          #allocation7 [shape = 'u32[6]{0}', space=smem, size = 0x18, scoped, tag = 'DMA stride descriptor']
          %s2085 = smul.u32 2, %s25
          %s2087 = ssub.s32 1024, 1024
          %2088 = vsyncadd %s2078, %s2087
          %s2089 = smul.addr %s24, 16
          %s2090 = sadd.s32 %s2085, %s2089
          %s2091 = smul.addr %s2090, 128
          %s2092 = scalar_lea.hbm %s5, %s2091
          %s2094 = sshll.u32 1, 14
          %s2095 = sxor.u32 4294967295, %s2094
          %s2098 = sshll.u32 7, 18
          %s2099 = sxor.u32 4294967295, %s2098
          %s2100 = sand.u32 0, %s2099
          %s2102 = sor.u32 %s2100, 0
          %s2103 = sshll.u32 %s2081, 4
          %s2104 = int_to_ptr.vmem [resolvable:$true] %s2103
          %2110 = sst [smem:[#allocation7]] 256
          %s2111 = scalar_lea.smem [#allocation7], 1
          %2112 = sst [smem:[%s2111]] 512
          %s2113 = scalar_lea.smem [#allocation7], 2
          %2114 = sst [smem:[%s2113]] 2
          %s2115 = scalar_lea.smem [#allocation7], 3
          %2116 = sst [smem:[%s2115]] 128
          %s2117 = scalar_lea.smem [#allocation7], 4
          %2118 = sst [smem:[%s2117]] 128
          %s2119 = scalar_lea.smem [#allocation7], 5
          %2120 = sst [smem:[%s2119]] 8
          %2122 = dma.general %s2104, 1024, %s2092, %s2078, 131072, [#allocation7], %s2102, 0
        $region48: #{tpu_custom_call.1} parent=39 // pred_fallthru
          _
      $region40: #{tpu_custom_call.1} parent=5 // pred_fallthru
        _
      %p2123 = scmp.le.s32.totalorder 2, %s15
      // Predicated region
      $region49: #{tpu_custom_call.1} parent=5 // pred_check
        %p2124 = pneg %p2123
      $region50: #{tpu_custom_call.1} parent=5 // pred_check_branch
        %2126 = sbr.rel (%p2124) target = $region52
      $region51: #{tpu_custom_call.1} parent=5 // pred_region
        %s2127 = ssub.s32 %s15, 2
        // Predicated region
        $region53: #{tpu_custom_call.1} parent=51 // pred_check
          %p2128 = pneg %p170
        $region54: #{tpu_custom_call.1} parent=51 // pred_check_branch
          %2130 = sbr.rel (%p2128) target = $region56
        $region55: #{tpu_custom_call.1} parent=51 // pred_region
          %s2131 = sand.u32 %s155, 1
          %s2132 = scalar_lea.sflag [#allocation4], %s2131
          %s2133 = sand.u32 %s155, 1
          %s2134 = smul.addr %s2133, 64
          %s2135 = scalar_lea.vmem [#allocation5], %s2134
          %2136 = dma.done %s2132, 1024
        $region56: #{tpu_custom_call.1} parent=51 // pred_fallthru
          _
      $region52: #{tpu_custom_call.1} parent=5 // pred_fallthru
        _
    $region6: #{tpu_custom_call.1} parent=1 // loop_footer
      %s19 = sadd.s32 1, %s15
    $region7: #{tpu_custom_call.1} parent=1 // loop_footer_branch
      %14 = sbr.rel target = $region3
    $region8: #{tpu_custom_call.1} parent=1 // loop_exit
      _
    %2137 = vsyncpa [#allocation3], 1
    %s2138 = scalar_lea.sflag [#allocation3], 1
    %2139 = vsyncpa %s2138, 1
    %2140 = vsyncpa [#allocation4], 1
    %s2141 = scalar_lea.sflag [#allocation4], 1
    %2142 = vsyncpa %s2141, 1

</llo_original>
